<compile_context>
chip_gen: v6e
topology: v6e:2x2x1
jax: 0.10.0
libtpu: 0.0.40
codegen_flags: <defaults>
</compile_context>

<pallas_src>
import functools
import math

import jax
import jax.numpy as jnp
from jax.experimental import pallas as pl
from jax.experimental.pallas import tpu as pltpu

_LANES = 128
_VMEM_SPEC = pl.BlockSpec(memory_space=pltpu.MemorySpace.VMEM)


def _round_up(x, m):
    return ((x + m - 1) // m) * m


# ----------------------------- Pallas kernels ------------------------------


def _stem_pool_kernel(p_ref, w_ref, b_ref, o_ref, *, tile_m, hw, inv_hw):
    """im2col conv (BN2d folded into weights) + SiLU + fused global average pool.

    grid = (batch, row-tile); the pooled output block is resident in VMEM across the
    row-tile ("arbitrary") axis and accumulated into.
    """
    t = pl.program_id(1)

    @pl.when(t == 0)
    def _init():
        o_ref[...] = jnp.zeros_like(o_ref)

    # [tile_m, 27] bf16 @ [27, 128] bf16 -> f32 accumulation on the MXU.
    y = jnp.dot(p_ref[0], w_ref[...], preferred_element_type=jnp.float32)
    y = y + b_ref[...]                      # folded BatchNorm2d shift
    y = y * jax.nn.sigmoid(y)               # SiLU

    # Zero out contributions from zero-padded patch rows past the real Ho*Wo extent.
    row = jax.lax.broadcasted_iota(jnp.int32, (tile_m, 1), 0) + t * tile_m
    y = jnp.where(row < hw, y, 0.0)

    # Fused global average pool: accumulate 1/HW-scaled partial sums.
    o_ref[0] += jnp.sum(y, axis=0, keepdims=True) * inv_hw


def _erf_approx(x):
    # Abramowitz & Stegun 7.1.26 rational approximation (|err| <= 1.5e-7).
    # Matches PyTorch's exact-erf GELU to ~f32 noise without relying on an erf
    # lowering inside Mosaic.
    a1, a2, a3, a4, a5 = 0.254829592, -0.284496736, 1.421413741, -1.453152027, 1.061405429
    p = 0.3275911
    s = jnp.where(x >= 0.0, 1.0, -1.0)
    z = jnp.abs(x)
    t = 1.0 / (1.0 + p * z)
    poly = t * (a1 + t * (a2 + t * (a3 + t * (a4 + t * a5))))
    return s * (1.0 - poly * jnp.exp(-z * z))


def _gelu_exact(x):
    # PyTorch nn.GELU() default = exact erf form.
    return 0.5 * x * (1.0 + _erf_approx(x * 0.7071067811865476))


def _head_kernel(x_ref, wa_ref, ba_ref, wb_ref, bb_ref, wc_ref, bc_ref, o_ref):
    """Classifier head on pooled features; BN1d + trunk stand-in already folded
    into the weights.  Dropout(0.1) is identity in eval mode."""
    h = jnp.dot(x_ref[...].astype(jnp.bfloat16), wa_ref[...],
                preferred_element_type=jnp.float32) + ba_ref[...]
    h = _gelu_exact(h)
    h = jnp.dot(h.astype(jnp.bfloat16), wb_ref[...],
                preferred_element_type=jnp.float32) + bb_ref[...]
    h = _gelu_exact(h)
    o_ref[...] = jnp.dot(h.astype(jnp.bfloat16), wc_ref[...],
                         preferred_element_type=jnp.float32) + bc_ref[...]


# ----------------------------- wrappers / glue ------------------------------


def _im2col(x_nhwc, kh, kw, stride, pad):
    """Extract conv patches. Returns ([B, Ho*Wo, kh*kw*C], Ho, Wo)."""
    x = jnp.pad(x_nhwc, ((0, 0), (pad, pad), (pad, pad), (0, 0)))
    B, H, W, C = x.shape
    Ho = (H - kh) // stride + 1
    Wo = (W - kw) // stride + 1
    patches = []
    for i in range(kh):
        for j in range(kw):
            patches.append(x[:, i:i + Ho * stride:stride, j:j + Wo * stride:stride, :])
    p = jnp.concatenate(patches, axis=-1)       # [B, Ho, Wo, kh*kw*C]
    return p.reshape(B, Ho * Wo, kh * kw * C), Ho, Wo


def stem_pool(x_nchw, fp):
    """Fused stem Conv+BN+SiLU + global avg pool.  Returns pooled [B, 128] f32
    (48 real channels, lanes 48..127 are exact zeros)."""
    B = x_nchw.shape[0]
    x_nhwc = jnp.transpose(x_nchw.astype(jnp.bfloat16), (0, 2, 3, 1))   # NCHW -> NHWC, bf16
    patches, ho, wo = _im2col(x_nhwc, 3, 3, stride=2, pad=1)            # [B, HW, 27] bf16
    hw = ho * wo

    # Row tile: 512 for real-sized inputs (sized for v7x 32 MiB scoped / 64 MiB
    # physical VMEM with double buffering), smaller for toy inputs.
    tile_m = 512 if hw >= 512 else max(8, min(128, _round_up(hw, 8)))
    r = _round_up(hw, tile_m)
    n_t = r // tile_m
    if r != hw:
        patches = jnp.pad(patches, ((0, 0), (0, r - hw), (0, 0)))

    kernel = functools.partial(_stem_pool_kernel, tile_m=tile_m, hw=hw, inv_hw=1.0 / hw)
    out = pl.pallas_call(
        kernel,
        out_shape=jax.ShapeDtypeStruct((B, 8, _LANES), jnp.float32),
        grid=(B, n_t),
        in_specs=[
            pl.BlockSpec((1, tile_m, 27), lambda b, t: (b, t, 0)),       # patch rows (pipelined)
            pl.BlockSpec((27, _LANES), lambda b, t: (0, 0)),             # folded conv weight
            pl.BlockSpec((1, _LANES), lambda b, t: (0, 0)),              # folded BN shift
        ],
        out_specs=pl.BlockSpec((1, 8, _LANES), lambda b, t: (b, 0, 0)),  # resident accumulator
        compiler_params=pltpu.CompilerParams(
            dimension_semantics=("parallel", "arbitrary"),
            vmem_limit_bytes=32 * 1024 * 1024),
    )(patches, fp["w_stem"], fp["b_stem"])
    return out[:, 0, :]                                                  # [B, 128]


def classifier_head(pooled, fp):
    B = pooled.shape[0]
    args = (pooled, fp["wa"], fp["ba"], fp["wb"], fp["bb"], fp["wc"], fp["bc"])
    out = pl.pallas_call(
        _head_kernel,
        out_shape=jax.ShapeDtypeStruct((B, _LANES), jnp.float32),        # lane-dense, sliced below
        in_specs=[_VMEM_SPEC] * len(args),
        out_specs=_VMEM_SPEC,
        compiler_params=pltpu.CompilerParams(vmem_limit_bytes=32 * 1024 * 1024),
    )(*args)
    return out


@jax.jit
def network_forward(x_nchw, fparams):
    pooled = stem_pool(x_nchw, fparams)
    return classifier_head(pooled, fparams)[:, :8]


# ----------------------------- deterministic params ------------------------------


def init_params(key):
    """Raw (PyTorch-layout) deterministic stand-in parameters."""
    ks = jax.random.split(key, 16)
    f32 = jnp.float32

    def linear(k, fan_in, fan_out):
        bound = 1.0 / math.sqrt(fan_in)
        kw, kb = jax.random.split(k)
        w = jax.random.uniform(kw, (fan_in, fan_out), f32, -bound, bound)
        b = jax.random.uniform(kb, (1, fan_out), f32, -bound, bound)
        return w, b

    p = {}
    # Stem conv weight: PyTorch [48, 3, 3, 3] -> im2col layout [(kh*kw*Cin), Cout]
    w = jax.random.normal(ks[0], (48, 3, 3, 3), f32) * 0.1
    p["w_stem"] = jnp.transpose(w, (2, 3, 1, 0)).reshape(27, 48)
    p["g_stem"], p["b_stem"] = jnp.ones((1, 48), f32), jnp.zeros((1, 48), f32)
    p["m_stem"], p["v_stem"] = jnp.zeros((1, 48), f32), jnp.ones((1, 48), f32)

    # Stand-in trunk projection 48 -> 1792 (TODO(synk): real MBConv trunk).
    p["w_proj"], p["b_proj"] = linear(ks[1], 48, 1792)

    # Classifier head
    p["w1"], p["b1"] = linear(ks[2], 1792, 512)
    p["g1"], p["be1"] = jnp.ones((1, 512), f32), jnp.zeros((1, 512), f32)
    p["m1"], p["v1"] = jnp.zeros((1, 512), f32), jnp.ones((1, 512), f32)

    p["w2"], p["b2"] = linear(ks[3], 512, 128)
    p["g2"], p["be2"] = jnp.ones((1, 128), f32), jnp.zeros((1, 128), f32)
    p["m2"], p["v2"] = jnp.zeros((1, 128), f32), jnp.ones((1, 128), f32)

    p["w3"], p["b3"] = linear(ks[4], 128, 8)
    return p


def fold_params(p):
    """Precompute kernel-ready weights: fold BN2d into the stem conv, fold the
    48->1792 stand-in projection + BN1d layers into the head Linears, pad all
    feature dims to 128 lanes, cast matmul operands to bf16 (f32 biases)."""
    f32, bf16 = jnp.float32, jnp.bfloat16

    # Stem: Conv (no bias) followed by BN2d(eps=1e-3):  z*s + (beta - mean*s)
    s = p["g_stem"] / jnp.sqrt(p["v_stem"] + 1e-3)                 # [1, 48]
    w_stem = jnp.pad(p["w_stem"] * s, ((0, 0), (0, _LANES - 48)))  # [27, 128]
    b_stem = jnp.pad(p["b_stem"] - p["m_stem"] * s, ((0, 0), (0, _LANES - 48)))

    # Head layer 1: (48->1792 proj) @ Linear(1792,512), then BN1d(512) folded in.
    wa = p["w_proj"] @ p["w1"]                                     # [48, 512]
    ba = p["b_proj"] @ p["w1"] + p["b1"]                           # [1, 512]
    s1 = p["g1"] / jnp.sqrt(p["v1"] + 1e-5)
    wa = wa * s1
    ba = ba * s1 + (p["be1"] - p["m1"] * s1)
    wa = jnp.pad(wa, ((0, _LANES - 48), (0, 0)))                   # [128, 512] (zero rows for padded lanes)

    # Head layer 2: Linear(512,128) with BN1d(128) folded in.
    s2 = p["g2"] / jnp.sqrt(p["v2"] + 1e-5)
    wb = p["w2"] * s2                                              # [512, 128]
    bb = p["b2"] * s2 + (p["be2"] - p["m2"] * s2)                  # [1, 128]

    # Head layer 3: Linear(128, 8), output padded 8 -> 128 for lane-dense stores.
    wc = jnp.pad(p["w3"], ((0, 0), (0, _LANES - 8)))               # [128, 128]
    bc = jnp.pad(p["b3"], ((0, 0), (0, _LANES - 8)))               # [1, 128]

    return {
        "w_stem": w_stem.astype(bf16), "b_stem": b_stem.astype(f32),
        "wa": wa.astype(bf16), "ba": ba.astype(f32),
        "wb": wb.astype(bf16), "bb": bb.astype(f32),
        "wc": wc.astype(bf16), "bc": bc.astype(f32),
    }


# ----------------------------- main ------------------------------

if __name__ == "__main__":
    key = jax.random.PRNGKey(0)
    kx, kp = jax.random.split(key)

    # Small NCHW RGB batch consistent with the module.
    x = jax.random.normal(kx, (2, 3, 32, 32), jnp.float32)
    fparams = fold_params(init_params(kp))

    out = network_forward(x, fparams)
    out = jax.block_until_ready(out)
    assert out.shape == (2, 8), out.shape
    assert bool(jnp.all(jnp.isfinite(out)))
    print("KERNEL_OK")
</pallas_src>

<mosaic_0001>
module attributes {stable_mosaic.version = 11 : i64} {
  func.func @_stem_pool_kernel(%arg0: i32, %arg1: i32, %arg2: memref<1x128x27xbf16, #tpu.memory_space<vmem>>, %arg3: memref<27x128xbf16, #tpu.memory_space<vmem>>, %arg4: memref<1x128xf32, #tpu.memory_space<vmem>>, %arg5: memref<1x8x128xf32, #tpu.memory_space<vmem>>) attributes {dimension_semantics = [#tpu.dimension_semantics<parallel>, #tpu.dimension_semantics<arbitrary>], iteration_bounds = array<i64: 2, 2>, scalar_prefetch = 0 : i64, scratch_operands = 0 : i64, tpu.core_type = #tpu.core_type<tc>, window_params = [{transform_indices = @transform_0, window_bounds = array<i64: 1, 128, 27>}, {pipeline_mode = #tpu.pipeline_mode<synchronous>, transform_indices = @transform_1, window_bounds = array<i64: 27, 128>}, {pipeline_mode = #tpu.pipeline_mode<synchronous>, transform_indices = @transform_2, window_bounds = array<i64: 1, 128>}, {transform_indices = @transform_3, window_bounds = array<i64: 1, 8, 128>}]} {
    %c0_i32 = arith.constant 0 : i32
    %0 = arith.cmpi eq, %arg1, %c0_i32 : i32
    %1 = arith.extui %0 : i1 to i32
    %c0_i32_0 = arith.constant 0 : i32
    %2 = arith.cmpi ne, %1, %c0_i32_0 : i32
    scf.if %2 {
      %cst_17 = arith.constant 0.000000e+00 : f32
      %37 = vector.broadcast %cst_17 : f32 to vector<1x8x128xf32>
      %c0_18 = arith.constant 0 : index
      %c0_19 = arith.constant 0 : index
      %c0_20 = arith.constant 0 : index
      %38 = vector.load %arg5[%c0_18, %c0_19, %c0_20] : memref<1x8x128xf32, #tpu.memory_space<vmem>>, vector<1x8x128xf32>
      tpu.vector_store %arg5[%c0_18, %c0_19, %c0_20], %37 {strides = array<i32>} : memref<1x8x128xf32, #tpu.memory_space<vmem>>, vector<1x8x128xf32>,
    } else {
    }
    %c0 = arith.constant 0 : index
    %c0_1 = arith.constant 0 : index
    %c0_2 = arith.constant 0 : index
    %3 = vector.load %arg2[%c0, %c0_1, %c0_2] : memref<1x128x27xbf16, #tpu.memory_space<vmem>>, vector<1x128x27xbf16>
    %4 = vector.shape_cast %3 : vector<1x128x27xbf16> to vector<128x27xbf16>
    %c0_3 = arith.constant 0 : index
    %c0_4 = arith.constant 0 : index
    %5 = vector.load %arg3[%c0_3, %c0_4] : memref<27x128xbf16, #tpu.memory_space<vmem>>, vector<27x128xbf16>
    %cst = arith.constant dense<0.000000e+00> : vector<128x128xf32>
    %6 = tpu.matmul %4, %5, %cst {dimension_numbers = #tpu.dot_dimension_numbers<[1], [0], [0], [1], [0, 0, 1, 1], [], []>} : vector<128x27xbf16>, vector<27x128xbf16>, vector<128x128xf32> -> vector<128x128xf32>
    %c0_5 = arith.constant 0 : index
    %c0_6 = arith.constant 0 : index
    %7 = vector.load %arg4[%c0_5, %c0_6] : memref<1x128xf32, #tpu.memory_space<vmem>>, vector<1x128xf32>
    %8 = vector.broadcast %7 : vector<1x128xf32> to vector<128x128xf32>
    %9 = arith.addf %6, %8 : vector<128x128xf32>
    %10 = arith.negf %9 : vector<128x128xf32>
    %11 = math.exp %10 : vector<128x128xf32>
    %cst_7 = arith.constant 1.000000e+00 : f32
    %12 = vector.broadcast %cst_7 : f32 to vector<128x128xf32>
    %13 = arith.addf %12, %11 : vector<128x128xf32>
    %14 = arith.divf %12, %13 : vector<128x128xf32>
    %15 = arith.mulf %9, %14 : vector<128x128xf32>
    %16 = tpu.iota {dimensions = array<i32: 0>} : vector<128x1xi32>
    %c128_i32 = arith.constant 128 : i32
    %17 = arith.muli %arg1, %c128_i32 : i32
    %18 = vector.broadcast %17 : i32 to vector<128x1xi32>
    %19 = arith.addi %16, %18 : vector<128x1xi32>
    %c256_i32 = arith.constant 256 : i32
    %20 = vector.broadcast %c256_i32 : i32 to vector<128x1xi32>
    %21 = arith.cmpi slt, %19, %20 : vector<128x1xi32>
    %cst_8 = arith.constant 0.000000e+00 : f32
    %22 = vector.shape_cast %21 : vector<128x1xi1> to vector<128x1xi1>
    %23 = vector.broadcast %22 : vector<128x1xi1> to vector<128x128xi1>
    %24 = vector.broadcast %cst_8 : f32 to vector<128x128xf32>
    %25 = arith.select %23, %15, %24 : vector<128x128xi1>, vector<128x128xf32>
    %c0_9 = arith.constant 0 : index
    %c0_10 = arith.constant 0 : index
    %c0_11 = arith.constant 0 : index
    %26 = vector.load %arg5[%c0_9, %c0_10, %c0_11] : memref<1x8x128xf32, #tpu.memory_space<vmem>>, vector<1x8x128xf32>
    %27 = vector.shape_cast %26 : vector<1x8x128xf32> to vector<8x128xf32>
    %cst_12 = arith.constant dense<0.000000e+00> : vector<128xf32>
    %28 = vector.multi_reduction <add>, %25, %cst_12 [0] : vector<128x128xf32> to vector<128xf32>
    %29 = vector.shape_cast %28 : vector<128xf32> to vector<1x128xf32>
    %cst_13 = arith.constant 3.906250e-03 : f32
    %30 = vector.broadcast %cst_13 : f32 to vector<1x128xf32>
    %31 = arith.mulf %29, %30 : vector<1x128xf32>
    %32 = vector.broadcast %31 : vector<1x128xf32> to vector<8x128xf32>
    %33 = arith.addf %27, %32 : vector<8x128xf32>
    %c0_14 = arith.constant 0 : index
    %c0_15 = arith.constant 0 : index
    %c0_16 = arith.constant 0 : index
    %34 = vector.load %arg5[%c0_14, %c0_15, %c0_16] : memref<1x8x128xf32, #tpu.memory_space<vmem>>, vector<1x8x128xf32>
    %35 = vector.shape_cast %34 : vector<1x8x128xf32> to vector<8x128xf32>
    %36 = vector.shape_cast %33 : vector<8x128xf32> to vector<1x8x128xf32>
    tpu.vector_store %arg5[%c0_14, %c0_15, %c0_16], %36 {strides = array<i32>} : memref<1x8x128xf32, #tpu.memory_space<vmem>>, vector<1x8x128xf32>,
    return
  }
  func.func @transform_0(%arg0: i32, %arg1: i32) -> (i32, i32, i32) {
    %c0_i32 = arith.constant 0 : i32
    %c0_i32_0 = arith.constant 0 : i32
    return %arg0, %arg1, %c0_i32 : i32, i32, i32
  }
  func.func @transform_1(%arg0: i32, %arg1: i32) -> (i32, i32) {
    %c0_i32 = arith.constant 0 : i32
    %c0_i32_0 = arith.constant 0 : i32
    %c0_i32_1 = arith.constant 0 : i32
    return %c0_i32, %c0_i32_0 : i32, i32
  }
  func.func @transform_2(%arg0: i32, %arg1: i32) -> (i32, i32) {
    %c0_i32 = arith.constant 0 : i32
    %c0_i32_0 = arith.constant 0 : i32
    %c0_i32_1 = arith.constant 0 : i32
    return %c0_i32, %c0_i32_0 : i32, i32
  }
  func.func @transform_3(%arg0: i32, %arg1: i32) -> (i32, i32, i32) {
    %c0_i32 = arith.constant 0 : i32
    %c0_i32_0 = arith.constant 0 : i32
    %c0_i32_1 = arith.constant 0 : i32
    return %arg0, %c0_i32, %c0_i32_0 : i32, i32, i32
  }
}

module attributes {stable_mosaic.version = 11 : i64} {
  func.func @_head_kernel(%arg0: memref<2x128xf32, #tpu.memory_space<vmem>>, %arg1: memref<128x512xbf16, #tpu.memory_space<vmem>>, %arg2: memref<1x512xf32, #tpu.memory_space<vmem>>, %arg3: memref<512x128xbf16, #tpu.memory_space<vmem>>, %arg4: memref<1x128xf32, #tpu.memory_space<vmem>>, %arg5: memref<128x128xbf16, #tpu.memory_space<vmem>>, %arg6: memref<1x128xf32, #tpu.memory_space<vmem>>, %arg7: memref<2x128xf32, #tpu.memory_space<vmem>>) attributes {dimension_semantics = [], scalar_prefetch = 0 : i64, scratch_operands = 0 : i64, tpu.core_type = #tpu.core_type<tc>} {
    %c0 = arith.constant 0 : index
    %c0_0 = arith.constant 0 : index
    %0 = vector.load %arg0[%c0, %c0_0] : memref<2x128xf32, #tpu.memory_space<vmem>>, vector<2x128xf32>
    %1 = arith.truncf %0 : vector<2x128xf32> to vector<2x128xbf16>
    %c0_1 = arith.constant 0 : index
    %c0_2 = arith.constant 0 : index
    %2 = vector.load %arg1[%c0_1, %c0_2] : memref<128x512xbf16, #tpu.memory_space<vmem>>, vector<128x512xbf16>
    %cst = arith.constant dense<0.000000e+00> : vector<2x512xf32>
    %3 = tpu.matmul %1, %2, %cst {dimension_numbers = #tpu.dot_dimension_numbers<[1], [0], [0], [1], [0, 0, 1, 1], [], []>} : vector<2x128xbf16>, vector<128x512xbf16>, vector<2x512xf32> -> vector<2x512xf32>
    %c0_3 = arith.constant 0 : index
    %c0_4 = arith.constant 0 : index
    %4 = vector.load %arg2[%c0_3, %c0_4] : memref<1x512xf32, #tpu.memory_space<vmem>>, vector<1x512xf32>
    %5 = vector.broadcast %4 : vector<1x512xf32> to vector<2x512xf32>
    %6 = arith.addf %3, %5 : vector<2x512xf32>
    %cst_5 = arith.constant 5.000000e-01 : f32
    %7 = vector.broadcast %cst_5 : f32 to vector<2x512xf32>
    %8 = arith.mulf %7, %6 : vector<2x512xf32>
    %cst_6 = arith.constant 0.707106769 : f32
    %9 = vector.broadcast %cst_6 : f32 to vector<2x512xf32>
    %10 = arith.mulf %6, %9 : vector<2x512xf32>
    %cst_7 = arith.constant 0.000000e+00 : f32
    %11 = vector.broadcast %cst_7 : f32 to vector<2x512xf32>
    %12 = arith.cmpf oge, %10, %11 : vector<2x512xf32>
    %cst_8 = arith.constant 1.000000e+00 : f32
    %cst_9 = arith.constant -1.000000e+00 : f32
    %13 = vector.broadcast %cst_8 : f32 to vector<2x512xf32>
    %14 = vector.broadcast %cst_9 : f32 to vector<2x512xf32>
    %15 = arith.select %12, %13, %14 : vector<2x512xi1>, vector<2x512xf32>
    %16 = math.absf %10 : vector<2x512xf32>
    %cst_10 = arith.constant 0.327591091 : f32
    %17 = vector.broadcast %cst_10 : f32 to vector<2x512xf32>
    %18 = arith.mulf %17, %16 : vector<2x512xf32>
    %cst_11 = arith.constant 1.000000e+00 : f32
    %19 = vector.broadcast %cst_11 : f32 to vector<2x512xf32>
    %20 = arith.addf %19, %18 : vector<2x512xf32>
    %cst_12 = arith.constant 1.000000e+00 : f32
    %21 = vector.broadcast %cst_12 : f32 to vector<2x512xf32>
    %22 = arith.divf %21, %20 : vector<2x512xf32>
    %cst_13 = arith.constant 1.06140542 : f32
    %23 = vector.broadcast %cst_13 : f32 to vector<2x512xf32>
    %24 = arith.mulf %22, %23 : vector<2x512xf32>
    %cst_14 = arith.constant -1.45315206 : f32
    %25 = vector.broadcast %cst_14 : f32 to vector<2x512xf32>
    %26 = arith.addf %25, %24 : vector<2x512xf32>
    %27 = arith.mulf %22, %26 : vector<2x512xf32>
    %cst_15 = arith.constant 1.42141378 : f32
    %28 = vector.broadcast %cst_15 : f32 to vector<2x512xf32>
    %29 = arith.addf %28, %27 : vector<2x512xf32>
    %30 = arith.mulf %22, %29 : vector<2x512xf32>
    %cst_16 = arith.constant -0.284496725 : f32
    %31 = vector.broadcast %cst_16 : f32 to vector<2x512xf32>
    %32 = arith.addf %31, %30 : vector<2x512xf32>
    %33 = arith.mulf %22, %32 : vector<2x512xf32>
    %cst_17 = arith.constant 0.254829586 : f32
    %34 = vector.broadcast %cst_17 : f32 to vector<2x512xf32>
    %35 = arith.addf %34, %33 : vector<2x512xf32>
    %36 = arith.mulf %22, %35 : vector<2x512xf32>
    %cst_18 = arith.constant 0.000000e+00 : f32
    %37 = vector.broadcast %cst_18 : f32 to vector<2x512xf32>
    %38 = arith.subf %37, %16 : vector<2x512xf32>
    %39 = arith.mulf %38, %16 : vector<2x512xf32>
    %40 = math.exp %39 : vector<2x512xf32>
    %41 = arith.mulf %36, %40 : vector<2x512xf32>
    %cst_19 = arith.constant 1.000000e+00 : f32
    %42 = vector.broadcast %cst_19 : f32 to vector<2x512xf32>
    %43 = arith.subf %42, %41 : vector<2x512xf32>
    %44 = arith.mulf %15, %43 : vector<2x512xf32>
    %cst_20 = arith.constant 1.000000e+00 : f32
    %45 = vector.broadcast %cst_20 : f32 to vector<2x512xf32>
    %46 = arith.addf %45, %44 : vector<2x512xf32>
    %47 = arith.mulf %8, %46 : vector<2x512xf32>
    %48 = arith.truncf %47 : vector<2x512xf32> to vector<2x512xbf16>
    %c0_21 = arith.constant 0 : index
    %c0_22 = arith.constant 0 : index
    %49 = vector.load %arg3[%c0_21, %c0_22] : memref<512x128xbf16, #tpu.memory_space<vmem>>, vector<512x128xbf16>
    %cst_23 = arith.constant dense<0.000000e+00> : vector<2x128xf32>
    %50 = tpu.matmul %48, %49, %cst_23 {dimension_numbers = #tpu.dot_dimension_numbers<[1], [0], [0], [1], [0, 0, 1, 1], [], []>} : vector<2x512xbf16>, vector<512x128xbf16>, vector<2x128xf32> -> vector<2x128xf32>
    %c0_24 = arith.constant 0 : index
    %c0_25 = arith.constant 0 : index
    %51 = vector.load %arg4[%c0_24, %c0_25] : memref<1x128xf32, #tpu.memory_space<vmem>>, vector<1x128xf32>
    %52 = vector.broadcast %51 : vector<1x128xf32> to vector<2x128xf32>
    %53 = arith.addf %50, %52 : vector<2x128xf32>
    %cst_26 = arith.constant 5.000000e-01 : f32
    %54 = vector.broadcast %cst_26 : f32 to vector<2x128xf32>
    %55 = arith.mulf %54, %53 : vector<2x128xf32>
    %cst_27 = arith.constant 0.707106769 : f32
    %56 = vector.broadcast %cst_27 : f32 to vector<2x128xf32>
    %57 = arith.mulf %53, %56 : vector<2x128xf32>
    %cst_28 = arith.constant 0.000000e+00 : f32
    %58 = vector.broadcast %cst_28 : f32 to vector<2x128xf32>
    %59 = arith.cmpf oge, %57, %58 : vector<2x128xf32>
    %cst_29 = arith.constant 1.000000e+00 : f32
    %cst_30 = arith.constant -1.000000e+00 : f32
    %60 = vector.broadcast %cst_29 : f32 to vector<2x128xf32>
    %61 = vector.broadcast %cst_30 : f32 to vector<2x128xf32>
    %62 = arith.select %59, %60, %61 : vector<2x128xi1>, vector<2x128xf32>
    %63 = math.absf %57 : vector<2x128xf32>
    %cst_31 = arith.constant 0.327591091 : f32
    %64 = vector.broadcast %cst_31 : f32 to vector<2x128xf32>
    %65 = arith.mulf %64, %63 : vector<2x128xf32>
    %cst_32 = arith.constant 1.000000e+00 : f32
    %66 = vector.broadcast %cst_32 : f32 to vector<2x128xf32>
    %67 = arith.addf %66, %65 : vector<2x128xf32>
    %cst_33 = arith.constant 1.000000e+00 : f32
    %68 = vector.broadcast %cst_33 : f32 to vector<2x128xf32>
    %69 = arith.divf %68, %67 : vector<2x128xf32>
    %cst_34 = arith.constant 1.06140542 : f32
    %70 = vector.broadcast %cst_34 : f32 to vector<2x128xf32>
    %71 = arith.mulf %69, %70 : vector<2x128xf32>
    %cst_35 = arith.constant -1.45315206 : f32
    %72 = vector.broadcast %cst_35 : f32 to vector<2x128xf32>
    %73 = arith.addf %72, %71 : vector<2x128xf32>
    %74 = arith.mulf %69, %73 : vector<2x128xf32>
    %cst_36 = arith.constant 1.42141378 : f32
    %75 = vector.broadcast %cst_36 : f32 to vector<2x128xf32>
    %76 = arith.addf %75, %74 : vector<2x128xf32>
    %77 = arith.mulf %69, %76 : vector<2x128xf32>
    %cst_37 = arith.constant -0.284496725 : f32
    %78 = vector.broadcast %cst_37 : f32 to vector<2x128xf32>
    %79 = arith.addf %78, %77 : vector<2x128xf32>
    %80 = arith.mulf %69, %79 : vector<2x128xf32>
    %cst_38 = arith.constant 0.254829586 : f32
    %81 = vector.broadcast %cst_38 : f32 to vector<2x128xf32>
    %82 = arith.addf %81, %80 : vector<2x128xf32>
    %83 = arith.mulf %69, %82 : vector<2x128xf32>
    %cst_39 = arith.constant 0.000000e+00 : f32
    %84 = vector.broadcast %cst_39 : f32 to vector<2x128xf32>
    %85 = arith.subf %84, %63 : vector<2x128xf32>
    %86 = arith.mulf %85, %63 : vector<2x128xf32>
    %87 = math.exp %86 : vector<2x128xf32>
    %88 = arith.mulf %83, %87 : vector<2x128xf32>
    %cst_40 = arith.constant 1.000000e+00 : f32
    %89 = vector.broadcast %cst_40 : f32 to vector<2x128xf32>
    %90 = arith.subf %89, %88 : vector<2x128xf32>
    %91 = arith.mulf %62, %90 : vector<2x128xf32>
    %cst_41 = arith.constant 1.000000e+00 : f32
    %92 = vector.broadcast %cst_41 : f32 to vector<2x128xf32>
    %93 = arith.addf %92, %91 : vector<2x128xf32>
    %94 = arith.mulf %55, %93 : vector<2x128xf32>
    %95 = arith.truncf %94 : vector<2x128xf32> to vector<2x128xbf16>
    %c0_42 = arith.constant 0 : index
    %c0_43 = arith.constant 0 : index
    %96 = vector.load %arg5[%c0_42, %c0_43] : memref<128x128xbf16, #tpu.memory_space<vmem>>, vector<128x128xbf16>
    %cst_44 = arith.constant dense<0.000000e+00> : vector<2x128xf32>
    %97 = tpu.matmul %95, %96, %cst_44 {dimension_numbers = #tpu.dot_dimension_numbers<[1], [0], [0], [1], [0, 0, 1, 1], [], []>} : vector<2x128xbf16>, vector<128x128xbf16>, vector<2x128xf32> -> vector<2x128xf32>
    %c0_45 = arith.constant 0 : index
    %c0_46 = arith.constant 0 : index
    %98 = vector.load %arg6[%c0_45, %c0_46] : memref<1x128xf32, #tpu.memory_space<vmem>>, vector<1x128xf32>
    %99 = vector.broadcast %98 : vector<1x128xf32> to vector<2x128xf32>
    %100 = arith.addf %97, %99 : vector<2x128xf32>
    %c0_47 = arith.constant 0 : index
    %c0_48 = arith.constant 0 : index
    %101 = vector.load %arg7[%c0_47, %c0_48] : memref<2x128xf32, #tpu.memory_space<vmem>>, vector<2x128xf32>
    tpu.vector_store %arg7[%c0_47, %c0_48], %100 {strides = array<i32>} : memref<2x128xf32, #tpu.memory_space<vmem>>, vector<2x128xf32>,
    return
  }
}

</mosaic_0001>

<llo_original>
// kernel: network_forward.2
$region0: #{network_forward.2}
  #allocation0 [shape = 'u32[]', space=smem, size = 0x4, offset = 0x4, fixed_abs, tag = 'smem constant byte address 0x4 - core index']
  #allocation1 [shape = 'u32[144,128]{1,0:T(1,128)}', space=vmem, size = 0x12000, scoped, tag = 'internal scratch']
  %s0 = inlined_call_operand.vmem [shape: bf16[2,256,27], index: 0, kind: input, shape index: {}]
  %s1 = inlined_call_operand.vmem [shape: bf16[27,128], index: 1, kind: input, shape index: {}]
  %s2 = inlined_call_operand.vmem [shape: f32[1,128], index: 2, kind: input, shape index: {}]
  %s3 = inlined_call_operand.vmem [shape: f32[2,8,128], index: 3, kind: output, shape index: {}]
  %s4 = sld [smem:[#allocation0]]
  $region49: #{network_forward.2} parent=0
    _
  %s6 = ssub.s32 1, %s4
  %s7 = scalar_select 0, %s6, %s4
  loop: start=0, step=1, limit=6
  $region2: #{network_forward.2} parent=0 // loop_pre_header
    _
  $region3: #{network_forward.2} parent=0 // loop_header
    %s9 = sphi 0, %s13
    %p10 = scmp.ge.s32.totalorder %s9, 6
    %s16 = sphi 0, %s28
    %s17 = sphi 0, %s24
    %s18 = sphi 0, %s16
    %s19 = sphi 0, %s17
    %s20 = sphi 0, %s18
    %s21 = sphi 0, %s19
    %s33 = sphi 0, %s35
    %s36 = sphi 0, %s33
    %s37 = sphi 0, %s36
    %s53 = sphi 0, %s37
    %s57 = sphi 0, %s57
    %s59 = sphi 0, %s57
    %s60 = sphi 0, %s59
    %s74 = sphi 0, %s60
    %s78 = sphi 0, %s78
    %s80 = sphi 0, %s78
    %s81 = sphi 0, %s80
    %s95 = sphi 0, %s81
    %s101 = sphi 0, %s103
    %s104 = sphi 0, %s101
    %s105 = sphi 0, %s104
    %s121 = sphi 0, %s105
  $region4: #{network_forward.2} parent=0 // loop_header_branch
    %12 = sbr.rel (%p10) target = $region8
  $region5: #{network_forward.2} parent=0 // loop_body
    %s14 = ssub.s32 %s9, 1
    %s15 = ssub.s32 %s9, 2
    %s22 = sadd.s32 1, %s17
    %p23 = scmp.ge.s32.totalorder %s22, 2
    %s24 = scalar_select %p23, 0, %s22
    %s25 = sadd.s32 1, %s16
    %s26 = scalar_select %p23, %s25, %s16
    %p27 = scmp.ge.s32.totalorder %s26, 2
    %s28 = scalar_select %p27, 0, %s26
    %s29 = ssub.s32 %s16, %s28
    %s30 = ssub.s32 %s17, %s24
    %s31 = sor.u32 %s29, %s30
    %p32 = scmp.eq.s32.totalorder %s31, 0
    %s34 = sadd.s32 %s33, 1
    %s35 = scalar_select %p32, %s33, %s34
    %p38 = pneg %p32
    %p39 = scmp.eq.s32.totalorder %s9, 3
    %p40 = por %p38, %p39
    %p41 = scmp.ne.s32.totalorder %s33, %s36
    %p42 = scmp.eq.s32.totalorder %s9, 0
    %p43 = por %p41, %p42
    %p44 = scmp.ne.s32.totalorder %s33, %s36
    %p45 = scmp.eq.s32.totalorder %s14, 3
    %p46 = por %p44, %p45
    %p47 = scmp.ne.s32.totalorder %s36, %s37
    %p48 = scmp.eq.s32.totalorder %s14, 0
    %p49 = por %p47, %p48
    %p50 = scmp.ne.s32.totalorder %s36, %s37
    %p51 = scmp.eq.s32.totalorder %s15, 3
    %p52 = por %p50, %p51
    %p54 = scmp.ne.s32.totalorder %s37, %s53
    %p55 = scmp.eq.s32.totalorder %s15, 0
    %p56 = por %p54, %p55
    %s58 = sadd.s32 %s57, 1
    %p61 = scmp.eq.s32.totalorder %s9, 3
    %p62 = scmp.ne.s32.totalorder %s57, %s59
    %p63 = scmp.eq.s32.totalorder %s9, 0
    %p64 = por %p62, %p63
    %p65 = scmp.ne.s32.totalorder %s57, %s59
    %p66 = scmp.eq.s32.totalorder %s14, 3
    %p67 = por %p65, %p66
    %p68 = scmp.ne.s32.totalorder %s59, %s60
    %p69 = scmp.eq.s32.totalorder %s14, 0
    %p70 = por %p68, %p69
    %p71 = scmp.ne.s32.totalorder %s59, %s60
    %p72 = scmp.eq.s32.totalorder %s15, 3
    %p73 = por %p71, %p72
    %p75 = scmp.ne.s32.totalorder %s60, %s74
    %p76 = scmp.eq.s32.totalorder %s15, 0
    %p77 = por %p75, %p76
    %s79 = sadd.s32 %s78, 1
    %p82 = scmp.eq.s32.totalorder %s9, 3
    %p83 = scmp.ne.s32.totalorder %s78, %s80
    %p84 = scmp.eq.s32.totalorder %s9, 0
    %p85 = por %p83, %p84
    %p86 = scmp.ne.s32.totalorder %s78, %s80
    %p87 = scmp.eq.s32.totalorder %s14, 3
    %p88 = por %p86, %p87
    %p89 = scmp.ne.s32.totalorder %s80, %s81
    %p90 = scmp.eq.s32.totalorder %s14, 0
    %p91 = por %p89, %p90
    %p92 = scmp.ne.s32.totalorder %s80, %s81
    %p93 = scmp.eq.s32.totalorder %s15, 3
    %p94 = por %p92, %p93
    %p96 = scmp.ne.s32.totalorder %s81, %s95
    %p97 = scmp.eq.s32.totalorder %s15, 0
    %p98 = por %p96, %p97
    %s99 = ssub.s32 %s16, %s28
    %p100 = scmp.eq.s32.totalorder %s99, 0
    %s102 = sadd.s32 %s101, 1
    %s103 = scalar_select %p100, %s101, %s102
    %p106 = pneg %p100
    %p107 = scmp.eq.s32.totalorder %s9, 3
    %p108 = por %p106, %p107
    %p109 = scmp.ne.s32.totalorder %s101, %s104
    %p110 = scmp.eq.s32.totalorder %s9, 0
    %p111 = por %p109, %p110
    %p112 = scmp.ne.s32.totalorder %s101, %s104
    %p113 = scmp.eq.s32.totalorder %s14, 3
    %p114 = por %p112, %p113
    %p115 = scmp.ne.s32.totalorder %s104, %s105
    %p116 = scmp.eq.s32.totalorder %s14, 0
    %p117 = por %p115, %p116
    %p118 = scmp.ne.s32.totalorder %s104, %s105
    %p119 = scmp.eq.s32.totalorder %s15, 3
    %p120 = por %p118, %p119
    %p122 = scmp.ne.s32.totalorder %s105, %s121
    %p123 = scmp.eq.s32.totalorder %s15, 0
    %p124 = por %p122, %p123
    %p125 = scmp.le.s32.totalorder 1, %s9
    %p126 = scmp.lt.s32.totalorder %s9, 5
    %p127 = pnand %p125, %p126
    %p128 = pneg %p127
    // Predicated region
    $region9: #{network_forward.2} parent=5 // pred_check
      _
    $region10: #{network_forward.2} parent=5 // pred_check_branch
      %130 = sbr.rel (%p127) target = $region12
    $region11: #{network_forward.2} parent=5 // pred_region
      %s131 = ssub.s32 %s9, 1
      // Predicated region
      $region13: #{network_forward.2} parent=11 // pred_check
        %p132 = pneg %p70
      $region14: #{network_forward.2} parent=11 // pred_check_branch
        %134 = sbr.rel (%p132) target = $region16
      $region15: #{network_forward.2} parent=11 // pred_region
        _
      $region16: #{network_forward.2} parent=11 // pred_fallthru
        _
      // Predicated region
      $region17: #{network_forward.2} parent=11 // pred_check
        %p135 = pneg %p91
      $region18: #{network_forward.2} parent=11 // pred_check_branch
        %137 = sbr.rel (%p135) target = $region20
      $region19: #{network_forward.2} parent=11 // pred_region
        _
      $region20: #{network_forward.2} parent=11 // pred_fallthru
        _
    $region12: #{network_forward.2} parent=5 // pred_fallthru
      _
    %p138 = scmp.lt.s32.totalorder %s9, 4
    // Predicated region
    $region21: #{network_forward.2} parent=5 // pred_check
      %p139 = pneg %p138
    $region22: #{network_forward.2} parent=5 // pred_check_branch
      %141 = sbr.rel (%p139) target = $region24
    $region23: #{network_forward.2} parent=5 // pred_region
      // Predicated region
      $region25: #{network_forward.2} parent=23 // pred_check
        %p142 = pneg %p43
      $region26: #{network_forward.2} parent=23 // pred_check_branch
        %144 = sbr.rel (%p142) target = $region28
      $region27: #{network_forward.2} parent=23 // pred_region
        %s145 = smul.u32 16, %s17
        %p146 = scmp.lt.s32.totalorder %s16, 1
        %s147 = scalar_select %p146, %s16, 1
        %p148 = scmp.lt.s32.totalorder %s145, 31
        %s149 = scalar_select %p148, %s145, 31
        %s150 = smul.addr %s147, 32
        %s151 = sadd.s32 %s149, %s150
        %s152 = smul.addr %s151, 4
        %s153 = scalar_lea.vmem %s0, %s152
        %s154 = smul.u32 16, %s17
      $region28: #{network_forward.2} parent=23 // pred_fallthru
        _
    $region24: #{network_forward.2} parent=5 // pred_fallthru
      _
    %p155 = scmp.le.s32.totalorder 1, %s9
    %p156 = scmp.lt.s32.totalorder %s9, 5
    %p157 = pnand %p155, %p156
    %p158 = pneg %p157
    // Predicated region
    $region29: #{network_forward.2} parent=5 // pred_check
      _
    $region30: #{network_forward.2} parent=5 // pred_check_branch
      %160 = sbr.rel (%p157) target = $region32
    $region31: #{network_forward.2} parent=5 // pred_region
      %s161 = ssub.s32 %s9, 1
      %s162 = smul.u32 16, %s19
      %p163 = scmp.lt.s32.totalorder %s18, 1
      %s164 = scalar_select %p163, %s18, 1
      %p165 = scmp.lt.s32.totalorder %s162, 31
      %s166 = scalar_select %p165, %s162, 31
      %s167 = smul.addr %s164, 32
      %s168 = sadd.s32 %s166, %s167
      %s169 = smul.addr %s168, 4
      %s170 = scalar_lea.vmem %s0, %s169
      %p171 = pneg %p49
      %p172 = pneg %p46
      %p173 = pneg %p70
      %p174 = pneg %p67
      %p175 = pneg %p91
      %p176 = pneg %p88
      %p177 = pneg %p117
      %p178 = pneg %p114
      %p179 = scmp.lt.s32.totalorder %s18, 1
      %s180 = scalar_select %p179, %s18, 1
      %s181 = smul.addr %s180, 8
      %s182 = scalar_lea.vmem %s3, %s181
      %s183 = smul.u32 16, %s19
      %p184 = scmp.lt.s32.totalorder %s18, 1
      %s185 = scalar_select %p184, %s18, 1
      %p186 = scmp.lt.s32.totalorder %s183, 31
      %s187 = scalar_select %p186, %s183, 31
      %s188 = smul.addr %s185, 32
      %s189 = sadd.s32 %s187, %s188
      %s190 = smul.addr %s189, 4
      %s191 = scalar_lea.vmem %s0, %s190
      %s192 = smul.u32 16, %s19
      %p193 = scmp.lt.s32.totalorder %s18, 1
      %s194 = scalar_select %p193, %s18, 1
      %s195 = smul.addr %s194, 8
      %s196 = scalar_lea.vmem %s3, %s195
      %p198 = scmp.eq.s32.totalorder %s19, 0
      // Predicated region
      $region33: #{network_forward.2} parent=31 // pred_check
        %p199 = pneg %p198
      $region34: #{network_forward.2} parent=31 // pred_check_branch
        %201 = sbr.rel (%p199) target = $region36
      $region35: #{network_forward.2} parent=31 // pred_region
        %202 = vst [vmem:[%s196] sm:$0xff] 0.0
      $region36: #{network_forward.2} parent=31 // pred_fallthru
        _
      %v203 = vld [vmem:[%s191] sm:$0xf]
      %v204 = vld [vmem:[%s191 + $0x4] sm:$0xf]
      %v205 = vld [vmem:[%s191 + $0x8] sm:$0xf]
      %v206 = vld [vmem:[%s191 + $0xc] sm:$0xf]
      %v207 = vld [vmem:[%s191 + $0x10] sm:$0xf]
      %v208 = vld [vmem:[%s191 + $0x14] sm:$0xf]
      %v209 = vld [vmem:[%s191 + $0x18] sm:$0xf]
      %v210 = vld [vmem:[%s191 + $0x1c] sm:$0xf]
      %v211 = vld [vmem:[%s191 + $0x20] sm:$0xf]
      %v212 = vld [vmem:[%s191 + $0x24] sm:$0xf]
      %v213 = vld [vmem:[%s191 + $0x28] sm:$0xf]
      %v214 = vld [vmem:[%s191 + $0x2c] sm:$0xf]
      %v215 = vld [vmem:[%s191 + $0x30] sm:$0xf]
      %v216 = vld [vmem:[%s191 + $0x34] sm:$0xf]
      %v217 = vld [vmem:[%s191 + $0x38] sm:$0xf]
      %v218 = vld [vmem:[%s191 + $0x3c] sm:$0xf]
      %v219 = vld [vmem:[%s1] sm:$0xf]
      %v220 = vld [vmem:[%s1 + $0x4] sm:$0xf]
      %v221 = vld [vmem:[%s1 + $0x8] sm:$0xf]
      %v222 = vld [vmem:[%s1 + $0xc] sm:$0x3]
      %v223 = vld [vmem:[%s2] sm:$0x1]
      %v225 = vlaneseq
      %v226 = vshrl.u32 %v225, 7
      %v227 = vsub.s32 0, %v226
      %v228 = vrot.slane %v223, %v227
      %v246 = vunpack.c.l.b16 %v203
      %v247 = vunpack.c.l.b16 %v204
      %v248 = vunpack.c.l.b16 %v205
      %v249 = vunpack.c.l.b16 %v206
      %v250 = vunpack.c.l.b16 %v207
      %v251 = vunpack.c.l.b16 %v208
      %v252 = vunpack.c.l.b16 %v209
      %v253 = vunpack.c.l.b16 %v210
      %v254 = vunpack.c.l.b16 %v211
      %v255 = vunpack.c.l.b16 %v212
      %v256 = vunpack.c.l.b16 %v213
      %v257 = vunpack.c.l.b16 %v214
      %v258 = vunpack.c.l.b16 %v215
      %v259 = vunpack.c.l.b16 %v216
      %v260 = vunpack.c.l.b16 %v217
      %v261 = vunpack.c.l.b16 %v218
      %v262 = vpack.c.b16 %v247, %v246
      %v263 = vpack.c.b16 %v249, %v248
      %v264 = vpack.c.b16 %v251, %v250
      %v265 = vpack.c.b16 %v253, %v252
      %v266 = vpack.c.b16 %v255, %v254
      %v267 = vpack.c.b16 %v257, %v256
      %v268 = vpack.c.b16 %v259, %v258
      %v269 = vpack.c.b16 %v261, %v260
      %v274 = vunpack.c.l.b16 %v219
      %v275 = vunpack.c.l.b16 %v220
      %v276 = vunpack.c.l.b16 %v221
      %v277 = vunpack.c.l.b16 %v222
      %v278 = vpack.c.b16 %v275, %v274
      %v279 = vpack.c.b16 %v277, %v276
      %vm281 = vcmask 220160
      %v283 = vsel %vm281, %v262, 0
      %v286 = vsel %vm281, %v263, 0
      %v289 = vsel %vm281, %v264, 0
      %v292 = vsel %vm281, %v265, 0
      %v295 = vsel %vm281, %v266, 0
      %v298 = vsel %vm281, %v267, 0
      %v301 = vsel %vm281, %v268, 0
      %v304 = vsel %vm281, %v269, 0
      %vm306 = vcmask 1044480
      %vm307 = vcmask 1045504
      %v308 = vsel %vm306, 4294967295, 65535
      %v309 = vsel %vm307, %v308, 0
      %v311 = vand.u32 %v279, %v309
      %313 = vmatprep.subr.bf16.mxu0 0
      %314 = vmatpush1.bf16.msra.mxu0 0
      %315 = vmatprep.subr.bf16.mxu0 0
      %316 = vmatpush1.bf16.msra.mxu0 0
      %317 = vmatprep.subr.bf16.mxu0 0
      %318 = vmatpush1.bf16.msra.mxu0 0
      %319 = vmatprep.subr.bf16.mxu0 0
      %320 = vmatpush1.bf16.msra.mxu0 0
      %321 = vmatprep.subr.bf16.mxu0 0
      %322 = vmatpush1.bf16.msra.mxu0 0
      %323 = vmatprep.subr.bf16.mxu0 0
      %324 = vmatpush1.bf16.msra.mxu0 0
      %325 = vmatprep.subr.bf16.mxu0 0
      %326 = vmatpush1.bf16.msra.mxu0 %v311
      %327 = vmatprep.subr.bf16.mxu0 0
      %328 = vmatpush1.bf16.msra.mxu0 %v278
      %329 = vmatprep.subr.bf16.mxu0 0
      %330 = vmatpush2.bf16.msra.mxu0 0
      %331 = vmatprep.subr.bf16.mxu0 0
      %332 = vmatpush2.bf16.msra.mxu0 0
      %333 = vmatprep.subr.bf16.mxu0 0
      %334 = vmatpush2.bf16.msra.mxu0 0
      %335 = vmatprep.subr.bf16.mxu0 0
      %336 = vmatpush2.bf16.msra.mxu0 0
      %337 = vmatprep.subr.bf16.mxu0 0
      %338 = vmatpush2.bf16.msra.mxu0 0
      %339 = vmatprep.subr.bf16.mxu0 0
      %340 = vmatpush2.bf16.msra.mxu0 0
      %341 = vmatprep.subr.bf16.mxu0 0
      %342 = vmatpush2.bf16.msra.mxu0 0
      %343 = vmatprep.subr.bf16.mxu0 0
      %344 = vmatpush2.bf16.msra.mxu0 0
      %345 = vmatprep.mubr.bf16.mxu0 0
      %346 = vmatmul.mubr.bf16.gmra.mxu0 %v283
      %v347 = vpop.f32.mrf.mxu0
      %v348 = vadd.f32 %v228, %v347
      %v349 = vpop.f32.mrf.mxu0
      %v350 = vpop.f32.mrf.mxu0
      %v351 = vadd.f32 %v228, %v350
      %v352 = vpop.f32.mrf.mxu0
      %353 = vmatprep.mubr.bf16.mxu0 0
      %354 = vmatmul.mubr.bf16.gmra.mxu0 %v286
      %v355 = vpop.f32.mrf.mxu0
      %v356 = vadd.f32 %v228, %v355
      %v357 = vpop.f32.mrf.mxu0
      %v358 = vpop.f32.mrf.mxu0
      %v359 = vadd.f32 %v228, %v358
      %v360 = vpop.f32.mrf.mxu0
      %361 = vmatprep.mubr.bf16.mxu0 0
      %362 = vmatmul.mubr.bf16.gmra.mxu0 %v289
      %v363 = vpop.f32.mrf.mxu0
      %v364 = vadd.f32 %v228, %v363
      %v365 = vpop.f32.mrf.mxu0
      %v366 = vpop.f32.mrf.mxu0
      %v367 = vadd.f32 %v228, %v366
      %v368 = vpop.f32.mrf.mxu0
      %369 = vmatprep.mubr.bf16.mxu0 0
      %370 = vmatmul.mubr.bf16.gmra.mxu0 %v292
      %v371 = vpop.f32.mrf.mxu0
      %v372 = vadd.f32 %v228, %v371
      %v373 = vpop.f32.mrf.mxu0
      %v374 = vpop.f32.mrf.mxu0
      %v375 = vadd.f32 %v228, %v374
      %v376 = vpop.f32.mrf.mxu0
      %377 = vmatprep.mubr.bf16.mxu0 0
      %378 = vmatmul.mubr.bf16.gmra.mxu0 %v295
      %v379 = vpop.f32.mrf.mxu0
      %v380 = vadd.f32 %v228, %v379
      %v381 = vpop.f32.mrf.mxu0
      %v382 = vpop.f32.mrf.mxu0
      %v383 = vadd.f32 %v228, %v382
      %v384 = vpop.f32.mrf.mxu0
      %385 = vmatprep.mubr.bf16.mxu0 0
      %386 = vmatmul.mubr.bf16.gmra.mxu0 %v298
      %v387 = vpop.f32.mrf.mxu0
      %v388 = vadd.f32 %v228, %v387
      %v389 = vpop.f32.mrf.mxu0
      %v390 = vpop.f32.mrf.mxu0
      %v391 = vadd.f32 %v228, %v390
      %v392 = vpop.f32.mrf.mxu0
      %393 = vmatprep.mubr.bf16.mxu0 0
      %394 = vmatmul.mubr.bf16.gmra.mxu0 %v301
      %v395 = vpop.f32.mrf.mxu0
      %v396 = vadd.f32 %v228, %v395
      %v397 = vpop.f32.mrf.mxu0
      %v398 = vpop.f32.mrf.mxu0
      %v399 = vadd.f32 %v228, %v398
      %v400 = vpop.f32.mrf.mxu0
      %401 = vmatprep.mubr.bf16.mxu0 0
      %402 = vmatmul.mubr.bf16.gmra.mxu0 %v304
      %v403 = vpop.f32.mrf.mxu0
      %v404 = vadd.f32 %v228, %v403
      %v405 = vpop.f32.mrf.mxu0
      %v406 = vpop.f32.mrf.mxu0
      %v407 = vadd.f32 %v228, %v406
      %v408 = vpop.f32.mrf.mxu0
      %409 = vdwg.mxu0
      %v410 = vxor.u32 %v348, 2147483648
      %v411 = vxor.u32 %v351, 2147483648
      %v412 = vxor.u32 %v356, 2147483648
      %v413 = vxor.u32 %v359, 2147483648
      %v414 = vxor.u32 %v364, 2147483648
      %v415 = vxor.u32 %v367, 2147483648
      %v416 = vxor.u32 %v372, 2147483648
      %v417 = vxor.u32 %v375, 2147483648
      %v418 = vxor.u32 %v380, 2147483648
      %v419 = vxor.u32 %v383, 2147483648
      %v420 = vxor.u32 %v388, 2147483648
      %v421 = vxor.u32 %v391, 2147483648
      %v422 = vxor.u32 %v396, 2147483648
      %v423 = vxor.u32 %v399, 2147483648
      %v424 = vxor.u32 %v404, 2147483648
      %v425 = vxor.u32 %v407, 2147483648
      %v426 = vmul.f32 %v410, 1.442695
      %v427 = vpow.pop %v426
      %v428 = vmul.f32 %v411, 1.442695
      %v429 = vpow.pop %v428
      %v430 = vmul.f32 %v412, 1.442695
      %v431 = vpow.pop %v430
      %v432 = vmul.f32 %v413, 1.442695
      %v433 = vpow.pop %v432
      %v434 = vmul.f32 %v414, 1.442695
      %v435 = vpow.pop %v434
      %v436 = vmul.f32 %v415, 1.442695
      %v437 = vpow.pop %v436
      %v438 = vmul.f32 %v416, 1.442695
      %v439 = vpow.pop %v438
      %v440 = vmul.f32 %v417, 1.442695
      %v441 = vpow.pop %v440
      %v442 = vmul.f32 %v418, 1.442695
      %v443 = vpow.pop %v442
      %v444 = vmul.f32 %v419, 1.442695
      %v445 = vpow.pop %v444
      %v446 = vmul.f32 %v420, 1.442695
      %v447 = vpow.pop %v446
      %v448 = vmul.f32 %v421, 1.442695
      %v449 = vpow.pop %v448
      %v450 = vmul.f32 %v422, 1.442695
      %v451 = vpow.pop %v450
      %v452 = vmul.f32 %v423, 1.442695
      %v453 = vpow.pop %v452
      %v454 = vmul.f32 %v424, 1.442695
      %v455 = vpow.pop %v454
      %v456 = vmul.f32 %v425, 1.442695
      %v457 = vpow.pop %v456
      %v458 = vadd.f32 %v427, 1.0
      %v459 = vadd.f32 %v429, 1.0
      %v460 = vadd.f32 %v431, 1.0
      %v461 = vadd.f32 %v433, 1.0
      %v462 = vadd.f32 %v435, 1.0
      %v463 = vadd.f32 %v437, 1.0
      %v464 = vadd.f32 %v439, 1.0
      %v465 = vadd.f32 %v441, 1.0
      %v466 = vadd.f32 %v443, 1.0
      %v467 = vadd.f32 %v445, 1.0
      %v468 = vadd.f32 %v447, 1.0
      %v469 = vadd.f32 %v449, 1.0
      %v470 = vadd.f32 %v451, 1.0
      %v471 = vadd.f32 %v453, 1.0
      %v472 = vadd.f32 %v455, 1.0
      %v473 = vadd.f32 %v457, 1.0
      %v474 = vrcp.pop %v458
      %v475 = vmul.f32 1.0, %v474
      %v476 = vrcp.pop %v459
      %v477 = vmul.f32 1.0, %v476
      %v478 = vrcp.pop %v460
      %v479 = vmul.f32 1.0, %v478
      %v480 = vrcp.pop %v461
      %v481 = vmul.f32 1.0, %v480
      %v482 = vrcp.pop %v462
      %v483 = vmul.f32 1.0, %v482
      %v484 = vrcp.pop %v463
      %v485 = vmul.f32 1.0, %v484
      %v486 = vrcp.pop %v464
      %v487 = vmul.f32 1.0, %v486
      %v488 = vrcp.pop %v465
      %v489 = vmul.f32 1.0, %v488
      %v490 = vrcp.pop %v466
      %v491 = vmul.f32 1.0, %v490
      %v492 = vrcp.pop %v467
      %v493 = vmul.f32 1.0, %v492
      %v494 = vrcp.pop %v468
      %v495 = vmul.f32 1.0, %v494
      %v496 = vrcp.pop %v469
      %v497 = vmul.f32 1.0, %v496
      %v498 = vrcp.pop %v470
      %v499 = vmul.f32 1.0, %v498
      %v500 = vrcp.pop %v471
      %v501 = vmul.f32 1.0, %v500
      %v502 = vrcp.pop %v472
      %v503 = vmul.f32 1.0, %v502
      %v504 = vrcp.pop %v473
      %v505 = vmul.f32 1.0, %v504
      %v506 = vmul.f32 %v348, %v475
      %v507 = vmul.f32 %v351, %v477
      %v508 = vmul.f32 %v356, %v479
      %v509 = vmul.f32 %v359, %v481
      %v510 = vmul.f32 %v364, %v483
      %v511 = vmul.f32 %v367, %v485
      %v512 = vmul.f32 %v372, %v487
      %v513 = vmul.f32 %v375, %v489
      %v514 = vmul.f32 %v380, %v491
      %v515 = vmul.f32 %v383, %v493
      %v516 = vmul.f32 %v388, %v495
      %v517 = vmul.f32 %v391, %v497
      %v518 = vmul.f32 %v396, %v499
      %v519 = vmul.f32 %v399, %v501
      %v520 = vmul.f32 %v404, %v503
      %v521 = vmul.f32 %v407, %v505
      %v522 = vlaneseq
      %v523 = vshrl.u32 %v522, 7
      %v524 = vadd.s32 %v523, 8
      %v525 = vadd.s32 %v523, 16
      %v526 = vadd.s32 %v523, 24
      %v527 = vadd.s32 %v523, 32
      %v528 = vadd.s32 %v523, 40
      %v529 = vadd.s32 %v523, 48
      %v530 = vadd.s32 %v523, 56
      %v531 = vadd.s32 %v523, 64
      %v532 = vadd.s32 %v523, 72
      %v533 = vadd.s32 %v523, 80
      %v534 = vadd.s32 %v523, 88
      %v535 = vadd.s32 %v523, 96
      %v536 = vadd.s32 %v523, 104
      %v537 = vadd.s32 %v523, 112
      %v538 = vadd.s32 %v523, 120
      %s539 = smul.u32 %s19, 128
      %v540 = vstv %s539
      %v541 = vadd.s32 %v523, %v540
      %v542 = vadd.s32 %v524, %v540
      %v543 = vadd.s32 %v525, %v540
      %v544 = vadd.s32 %v526, %v540
      %v545 = vadd.s32 %v527, %v540
      %v546 = vadd.s32 %v528, %v540
      %v547 = vadd.s32 %v529, %v540
      %v548 = vadd.s32 %v530, %v540
      %v549 = vadd.s32 %v531, %v540
      %v550 = vadd.s32 %v532, %v540
      %v551 = vadd.s32 %v533, %v540
      %v552 = vadd.s32 %v534, %v540
      %v553 = vadd.s32 %v535, %v540
      %v554 = vadd.s32 %v536, %v540
      %v555 = vadd.s32 %v537, %v540
      %v556 = vadd.s32 %v538, %v540
      %vm557 = vcmp.lt.s32.totalorder %v541, 256
      %vm558 = vcmp.lt.s32.totalorder %v542, 256
      %vm559 = vcmp.lt.s32.totalorder %v543, 256
      %vm560 = vcmp.lt.s32.totalorder %v544, 256
      %vm561 = vcmp.lt.s32.totalorder %v545, 256
      %vm562 = vcmp.lt.s32.totalorder %v546, 256
      %vm563 = vcmp.lt.s32.totalorder %v547, 256
      %vm564 = vcmp.lt.s32.totalorder %v548, 256
      %vm565 = vcmp.lt.s32.totalorder %v549, 256
      %vm566 = vcmp.lt.s32.totalorder %v550, 256
      %vm567 = vcmp.lt.s32.totalorder %v551, 256
      %vm568 = vcmp.lt.s32.totalorder %v552, 256
      %vm569 = vcmp.lt.s32.totalorder %v553, 256
      %vm570 = vcmp.lt.s32.totalorder %v554, 256
      %vm571 = vcmp.lt.s32.totalorder %v555, 256
      %vm572 = vcmp.lt.s32.totalorder %v556, 256
      %v573 = vsel %vm557, 1, 0
      %v574 = vsel %vm558, 1, 0
      %v575 = vsel %vm559, 1, 0
      %v576 = vsel %vm560, 1, 0
      %v577 = vsel %vm561, 1, 0
      %v578 = vsel %vm562, 1, 0
      %v579 = vsel %vm563, 1, 0
      %v580 = vsel %vm564, 1, 0
      %v581 = vsel %vm565, 1, 0
      %v582 = vsel %vm566, 1, 0
      %v583 = vsel %vm567, 1, 0
      %v584 = vsel %vm568, 1, 0
      %v585 = vsel %vm569, 1, 0
      %v586 = vsel %vm570, 1, 0
      %v587 = vsel %vm571, 1, 0
      %v588 = vsel %vm572, 1, 0
      %vm589 = vcmp.eq.s32.totalorder %v573, 1
      %vm590 = vcmp.eq.s32.totalorder %v574, 1
      %vm591 = vcmp.eq.s32.totalorder %v575, 1
      %vm592 = vcmp.eq.s32.totalorder %v576, 1
      %vm593 = vcmp.eq.s32.totalorder %v577, 1
      %vm594 = vcmp.eq.s32.totalorder %v578, 1
      %vm595 = vcmp.eq.s32.totalorder %v579, 1
      %vm596 = vcmp.eq.s32.totalorder %v580, 1
      %vm597 = vcmp.eq.s32.totalorder %v581, 1
      %vm598 = vcmp.eq.s32.totalorder %v582, 1
      %vm599 = vcmp.eq.s32.totalorder %v583, 1
      %vm600 = vcmp.eq.s32.totalorder %v584, 1
      %vm601 = vcmp.eq.s32.totalorder %v585, 1
      %vm602 = vcmp.eq.s32.totalorder %v586, 1
      %vm603 = vcmp.eq.s32.totalorder %v587, 1
      %vm604 = vcmp.eq.s32.totalorder %v588, 1
      %v605 = vsel %vm589, %v506, 0.0
      %v606 = vsel %vm590, %v507, 0.0
      %v607 = vsel %vm591, %v508, 0.0
      %v608 = vsel %vm592, %v509, 0.0
      %v609 = vsel %vm593, %v510, 0.0
      %v610 = vsel %vm594, %v511, 0.0
      %v611 = vsel %vm595, %v512, 0.0
      %v612 = vsel %vm596, %v513, 0.0
      %v613 = vsel %vm597, %v514, 0.0
      %v614 = vsel %vm598, %v515, 0.0
      %v615 = vsel %vm599, %v516, 0.0
      %v616 = vsel %vm600, %v517, 0.0
      %v617 = vsel %vm601, %v518, 0.0
      %v618 = vsel %vm602, %v519, 0.0
      %v619 = vsel %vm603, %v520, 0.0
      %v620 = vsel %vm604, %v521, 0.0
      %v621 = vld [vmem:[%s196] sm:$0xff]
      %v622 = vadd.f32 %v605, %v606
      %v623 = vadd.f32 %v622, %v607
      %v624 = vadd.f32 %v623, %v608
      %v625 = vadd.f32 %v624, %v609
      %v626 = vadd.f32 %v625, %v610
      %v627 = vadd.f32 %v626, %v611
      %v628 = vadd.f32 %v627, %v612
      %v629 = vadd.f32 %v628, %v613
      %v630 = vadd.f32 %v629, %v614
      %v631 = vadd.f32 %v630, %v615
      %v632 = vadd.f32 %v631, %v616
      %v633 = vadd.f32 %v632, %v617
      %v634 = vadd.f32 %v633, %v618
      %v635 = vadd.f32 %v634, %v619
      %v636 = vadd.f32 %v635, %v620
      %v637 = vrot.slane %v636, 4
      %v638 = vadd.f32 %v636, %v637
      %v639 = vrot.slane %v638, 2
      %v640 = vadd.f32 %v638, %v639
      %v641 = vrot.slane %v640, 1
      %v642 = vadd.f32 %v640, %v641
      %v643 = vmul.f32 %v642, 0.00390625
      %v644 = vadd.f32 %v621, %v643
      %645 = vst [vmem:[%s196] sm:$0xff] %v644
      %p646 = scmp.lt.s32.totalorder %s18, 1
      %s647 = scalar_select %p646, %s18, 1
      %s648 = smul.addr %s647, 8
      %s649 = scalar_lea.vmem %s3, %s648
      // Predicated region
      $region37: #{network_forward.2} parent=31 // pred_check
        %p650 = pneg %p114
      $region38: #{network_forward.2} parent=31 // pred_check_branch
        %652 = sbr.rel (%p650) target = $region40
      $region39: #{network_forward.2} parent=31 // pred_region
        _
      $region40: #{network_forward.2} parent=31 // pred_fallthru
        _
    $region32: #{network_forward.2} parent=5 // pred_fallthru
      _
    %p653 = scmp.le.s32.totalorder 2, %s9
    // Predicated region
    $region41: #{network_forward.2} parent=5 // pred_check
      %p654 = pneg %p653
    $region42: #{network_forward.2} parent=5 // pred_check_branch
      %656 = sbr.rel (%p654) target = $region44
    $region43: #{network_forward.2} parent=5 // pred_region
      %s657 = ssub.s32 %s9, 2
      // Predicated region
      $region45: #{network_forward.2} parent=43 // pred_check
        %p658 = pneg %p120
      $region46: #{network_forward.2} parent=43 // pred_check_branch
        %660 = sbr.rel (%p658) target = $region48
      $region47: #{network_forward.2} parent=43 // pred_region
        %p661 = scmp.lt.s32.totalorder %s20, 1
        %s662 = scalar_select %p661, %s20, 1
        %s663 = smul.addr %s662, 8
        %s664 = scalar_lea.vmem %s3, %s663
      $region48: #{network_forward.2} parent=43 // pred_fallthru
        _
    $region44: #{network_forward.2} parent=5 // pred_fallthru
      _
  $region6: #{network_forward.2} parent=0 // loop_footer
    %s13 = sadd.s32 1, %s9
  $region7: #{network_forward.2} parent=0 // loop_footer_branch
    %8 = sbr.rel target = $region3
  $region8: #{network_forward.2} parent=0 // loop_exit
    _

// kernel: network_forward.3
$region0: #{network_forward.3}
  #allocation0 [shape = 'u32[]', space=smem, size = 0x4, offset = 0x4, fixed_abs, tag = 'smem constant byte address 0x4 - core index']
  #allocation1 [shape = 'u32[144,128]{1,0:T(1,128)}', space=vmem, size = 0x12000, scoped, tag = 'internal scratch']
  %s0 = inlined_call_operand.vmem [shape: f32[2,128], index: 0, kind: input, shape index: {}]
  %s1 = inlined_call_operand.vmem [shape: bf16[128,512], index: 1, kind: input, shape index: {}]
  %s2 = inlined_call_operand.vmem [shape: f32[1,512], index: 2, kind: input, shape index: {}]
  %s3 = inlined_call_operand.vmem [shape: bf16[512,128], index: 3, kind: input, shape index: {}]
  %s4 = inlined_call_operand.vmem [shape: f32[1,128], index: 4, kind: input, shape index: {}]
  %s5 = inlined_call_operand.vmem [shape: bf16[128,128], index: 5, kind: input, shape index: {}]
  %s6 = inlined_call_operand.vmem [shape: f32[1,128], index: 6, kind: input, shape index: {}]
  %s7 = inlined_call_operand.hbm [shape: f32[2,128], index: 7, kind: output, shape index: {}]
  %s8 = sld [smem:[#allocation0]]
  $region38: #{network_forward.3} parent=0
    _
  %s10 = ssub.s32 1, %s8
  %s11 = scalar_select 0, %s10, %s8
  $region1: #{network_forward.3} parent=0
    #allocation2 [shape = 'u8[1024]{0}', space=vmem, size = 0x400, scoped, tag = 'output window, operand 0, single buffered']
    #allocation3 [shape = 's32[1]{0}', space=sflag, size = 0x4, scoped, tag = 'scoped memory for network_forward.3']
    %12 = vsyncpa [#allocation3], 0
    // Predicated region
    $region2: #{network_forward.3} parent=1 // pred_check
      _
    $region3: #{network_forward.3} parent=1 // pred_check_branch
      %14 = sbr.rel (0) target = $region5
    $region4: #{network_forward.3} parent=1 // pred_region
      _
    $region5: #{network_forward.3} parent=1 // pred_fallthru
      _
    // Predicated region
    $region6: #{network_forward.3} parent=1 // pred_check
      _
    $region7: #{network_forward.3} parent=1 // pred_check_branch
      %16 = sbr.rel (0) target = $region9
    $region8: #{network_forward.3} parent=1 // pred_region
      _
    $region9: #{network_forward.3} parent=1 // pred_fallthru
      _
    // Predicated region
    $region10: #{network_forward.3} parent=1 // pred_check
      _
    $region11: #{network_forward.3} parent=1 // pred_check_branch
      %18 = sbr.rel (0) target = $region13
    $region12: #{network_forward.3} parent=1 // pred_region
      _
    $region13: #{network_forward.3} parent=1 // pred_fallthru
      _
    // Predicated region
    $region14: #{network_forward.3} parent=1 // pred_check
      _
    $region15: #{network_forward.3} parent=1 // pred_check_branch
      %20 = sbr.rel (0) target = $region17
    $region16: #{network_forward.3} parent=1 // pred_region
      _
    $region17: #{network_forward.3} parent=1 // pred_fallthru
      _
    // Predicated region
    $region18: #{network_forward.3} parent=1 // pred_check
      _
    $region19: #{network_forward.3} parent=1 // pred_check_branch
      %22 = sbr.rel (0) target = $region21
    $region20: #{network_forward.3} parent=1 // pred_region
      _
    $region21: #{network_forward.3} parent=1 // pred_fallthru
      _
    // Predicated region
    $region22: #{network_forward.3} parent=1 // pred_check
      _
    $region23: #{network_forward.3} parent=1 // pred_check_branch
      %24 = sbr.rel (0) target = $region25
    $region24: #{network_forward.3} parent=1 // pred_region
      _
    $region25: #{network_forward.3} parent=1 // pred_fallthru
      _
    // Predicated region
    $region26: #{network_forward.3} parent=1 // pred_check
      _
    $region27: #{network_forward.3} parent=1 // pred_check_branch
      %26 = sbr.rel (0) target = $region29
    $region28: #{network_forward.3} parent=1 // pred_region
      _
    $region29: #{network_forward.3} parent=1 // pred_fallthru
      _
    %v28 = vld [vmem:[%s0] sm:$0x3]
    %v29 = vpack.c.bf16 %v28, %v28
    %v30 = vld [vmem:[%s1] sm:$0xff]
    %v31 = vld [vmem:[%s1 + $0x8] sm:$0xff]
    %v32 = vld [vmem:[%s1 + $0x10] sm:$0xff]
    %v33 = vld [vmem:[%s1 + $0x18] sm:$0xff]
    %v34 = vld [vmem:[%s1 + $0x20] sm:$0xff]
    %v35 = vld [vmem:[%s1 + $0x28] sm:$0xff]
    %v36 = vld [vmem:[%s1 + $0x30] sm:$0xff]
    %v37 = vld [vmem:[%s1 + $0x38] sm:$0xff]
    %v38 = vld [vmem:[%s1 + $0x40] sm:$0xff]
    %v39 = vld [vmem:[%s1 + $0x48] sm:$0xff]
    %v40 = vld [vmem:[%s1 + $0x50] sm:$0xff]
    %v41 = vld [vmem:[%s1 + $0x58] sm:$0xff]
    %v42 = vld [vmem:[%s1 + $0x60] sm:$0xff]
    %v43 = vld [vmem:[%s1 + $0x68] sm:$0xff]
    %v44 = vld [vmem:[%s1 + $0x70] sm:$0xff]
    %v45 = vld [vmem:[%s1 + $0x78] sm:$0xff]
    %v46 = vld [vmem:[%s1 + $0x80] sm:$0xff]
    %v47 = vld [vmem:[%s1 + $0x88] sm:$0xff]
    %v48 = vld [vmem:[%s1 + $0x90] sm:$0xff]
    %v49 = vld [vmem:[%s1 + $0x98] sm:$0xff]
    %v50 = vld [vmem:[%s1 + $0xa0] sm:$0xff]
    %v51 = vld [vmem:[%s1 + $0xa8] sm:$0xff]
    %v52 = vld [vmem:[%s1 + $0xb0] sm:$0xff]
    %v53 = vld [vmem:[%s1 + $0xb8] sm:$0xff]
    %v54 = vld [vmem:[%s1 + $0xc0] sm:$0xff]
    %v55 = vld [vmem:[%s1 + $0xc8] sm:$0xff]
    %v56 = vld [vmem:[%s1 + $0xd0] sm:$0xff]
    %v57 = vld [vmem:[%s1 + $0xd8] sm:$0xff]
    %v58 = vld [vmem:[%s1 + $0xe0] sm:$0xff]
    %v59 = vld [vmem:[%s1 + $0xe8] sm:$0xff]
    %v60 = vld [vmem:[%s1 + $0xf0] sm:$0xff]
    %v61 = vld [vmem:[%s1 + $0xf8] sm:$0xff]
    %v62 = vld [vmem:[%s2] sm:$0xf]
    %v64 = vlaneseq
    %v65 = vshrl.u32 %v64, 7
    %v66 = vsub.s32 0, %v65
    %v67 = vrot.slane %v62, %v66
    %v68 = vlaneseq
    %v69 = vshrl.u32 %v68, 7
    %v70 = vsub.s32 1, %v69
    %v71 = vrot.slane %v62, %v70
    %v72 = vlaneseq
    %v73 = vshrl.u32 %v72, 7
    %v74 = vsub.s32 2, %v73
    %v75 = vrot.slane %v62, %v74
    %v76 = vlaneseq
    %v77 = vshrl.u32 %v76, 7
    %v78 = vsub.s32 3, %v77
    %v79 = vrot.slane %v62, %v78
    %v116 = vunpack.c.l.b16 %v30
    %v117 = vunpack.c.h.b16 %v30
    %v118 = vunpack.c.l.b16 %v31
    %v119 = vunpack.c.h.b16 %v31
    %v120 = vunpack.c.l.b16 %v32
    %v121 = vunpack.c.h.b16 %v32
    %v122 = vunpack.c.l.b16 %v33
    %v123 = vunpack.c.h.b16 %v33
    %v124 = vunpack.c.l.b16 %v34
    %v125 = vunpack.c.h.b16 %v34
    %v126 = vunpack.c.l.b16 %v35
    %v127 = vunpack.c.h.b16 %v35
    %v128 = vunpack.c.l.b16 %v36
    %v129 = vunpack.c.h.b16 %v36
    %v130 = vunpack.c.l.b16 %v37
    %v131 = vunpack.c.h.b16 %v37
    %v132 = vunpack.c.l.b16 %v38
    %v133 = vunpack.c.h.b16 %v38
    %v134 = vunpack.c.l.b16 %v39
    %v135 = vunpack.c.h.b16 %v39
    %v136 = vunpack.c.l.b16 %v40
    %v137 = vunpack.c.h.b16 %v40
    %v138 = vunpack.c.l.b16 %v41
    %v139 = vunpack.c.h.b16 %v41
    %v140 = vunpack.c.l.b16 %v42
    %v141 = vunpack.c.h.b16 %v42
    %v142 = vunpack.c.l.b16 %v43
    %v143 = vunpack.c.h.b16 %v43
    %v144 = vunpack.c.l.b16 %v44
    %v145 = vunpack.c.h.b16 %v44
    %v146 = vunpack.c.l.b16 %v45
    %v147 = vunpack.c.h.b16 %v45
    %v148 = vunpack.c.l.b16 %v46
    %v149 = vunpack.c.h.b16 %v46
    %v150 = vunpack.c.l.b16 %v47
    %v151 = vunpack.c.h.b16 %v47
    %v152 = vunpack.c.l.b16 %v48
    %v153 = vunpack.c.h.b16 %v48
    %v154 = vunpack.c.l.b16 %v49
    %v155 = vunpack.c.h.b16 %v49
    %v156 = vunpack.c.l.b16 %v50
    %v157 = vunpack.c.h.b16 %v50
    %v158 = vunpack.c.l.b16 %v51
    %v159 = vunpack.c.h.b16 %v51
    %v160 = vunpack.c.l.b16 %v52
    %v161 = vunpack.c.h.b16 %v52
    %v162 = vunpack.c.l.b16 %v53
    %v163 = vunpack.c.h.b16 %v53
    %v164 = vunpack.c.l.b16 %v54
    %v165 = vunpack.c.h.b16 %v54
    %v166 = vunpack.c.l.b16 %v55
    %v167 = vunpack.c.h.b16 %v55
    %v168 = vunpack.c.l.b16 %v56
    %v169 = vunpack.c.h.b16 %v56
    %v170 = vunpack.c.l.b16 %v57
    %v171 = vunpack.c.h.b16 %v57
    %v172 = vunpack.c.l.b16 %v58
    %v173 = vunpack.c.h.b16 %v58
    %v174 = vunpack.c.l.b16 %v59
    %v175 = vunpack.c.h.b16 %v59
    %v176 = vunpack.c.l.b16 %v60
    %v177 = vunpack.c.h.b16 %v60
    %v178 = vunpack.c.l.b16 %v61
    %v179 = vunpack.c.h.b16 %v61
    %v180 = vpack.c.b16 %v120, %v116
    %v181 = vpack.c.b16 %v121, %v117
    %v182 = vpack.c.b16 %v122, %v118
    %v183 = vpack.c.b16 %v123, %v119
    %v184 = vpack.c.b16 %v128, %v124
    %v185 = vpack.c.b16 %v129, %v125
    %v186 = vpack.c.b16 %v130, %v126
    %v187 = vpack.c.b16 %v131, %v127
    %v188 = vpack.c.b16 %v136, %v132
    %v189 = vpack.c.b16 %v137, %v133
    %v190 = vpack.c.b16 %v138, %v134
    %v191 = vpack.c.b16 %v139, %v135
    %v192 = vpack.c.b16 %v144, %v140
    %v193 = vpack.c.b16 %v145, %v141
    %v194 = vpack.c.b16 %v146, %v142
    %v195 = vpack.c.b16 %v147, %v143
    %v196 = vpack.c.b16 %v152, %v148
    %v197 = vpack.c.b16 %v153, %v149
    %v198 = vpack.c.b16 %v154, %v150
    %v199 = vpack.c.b16 %v155, %v151
    %v200 = vpack.c.b16 %v160, %v156
    %v201 = vpack.c.b16 %v161, %v157
    %v202 = vpack.c.b16 %v162, %v158
    %v203 = vpack.c.b16 %v163, %v159
    %v204 = vpack.c.b16 %v168, %v164
    %v205 = vpack.c.b16 %v169, %v165
    %v206 = vpack.c.b16 %v170, %v166
    %v207 = vpack.c.b16 %v171, %v167
    %v208 = vpack.c.b16 %v176, %v172
    %v209 = vpack.c.b16 %v177, %v173
    %v210 = vpack.c.b16 %v178, %v174
    %v211 = vpack.c.b16 %v179, %v175
    %244 = vmatprep.subr.bf16.mxu0 %v209
    %245 = vmatpush1.bf16.msra.mxu0 %v208
    %246 = vmatprep.subr.bf16.mxu0 %v205
    %247 = vmatpush1.bf16.msra.mxu0 %v204
    %248 = vmatprep.subr.bf16.mxu0 %v201
    %249 = vmatpush1.bf16.msra.mxu0 %v200
    %250 = vmatprep.subr.bf16.mxu0 %v197
    %251 = vmatpush1.bf16.msra.mxu0 %v196
    %252 = vmatprep.subr.bf16.mxu0 %v193
    %253 = vmatpush1.bf16.msra.mxu0 %v192
    %254 = vmatprep.subr.bf16.mxu0 %v189
    %255 = vmatpush1.bf16.msra.mxu0 %v188
    %256 = vmatprep.subr.bf16.mxu0 %v185
    %257 = vmatpush1.bf16.msra.mxu0 %v184
    %258 = vmatprep.subr.bf16.mxu0 %v181
    %259 = vmatpush1.bf16.msra.mxu0 %v180
    %260 = vmatprep.subr.bf16.mxu0 0
    %261 = vmatpush2.bf16.msra.mxu0 0
    %262 = vmatprep.subr.bf16.mxu0 0
    %263 = vmatpush2.bf16.msra.mxu0 0
    %264 = vmatprep.subr.bf16.mxu0 0
    %265 = vmatpush2.bf16.msra.mxu0 0
    %266 = vmatprep.subr.bf16.mxu0 0
    %267 = vmatpush2.bf16.msra.mxu0 0
    %268 = vmatprep.subr.bf16.mxu0 0
    %269 = vmatpush2.bf16.msra.mxu0 0
    %270 = vmatprep.subr.bf16.mxu0 0
    %271 = vmatpush2.bf16.msra.mxu0 0
    %272 = vmatprep.subr.bf16.mxu0 0
    %273 = vmatpush2.bf16.msra.mxu0 0
    %274 = vmatprep.subr.bf16.mxu0 0
    %275 = vmatpush2.bf16.msra.mxu0 0
    %276 = vmatprep.mubr.bf16.mxu0 0
    %277 = vmatmul.mubr.bf16.gmra.mxu0 %v29
    %v278 = vpop.f32.mrf.mxu0
    %v279 = vadd.f32 %v67, %v278
    %v280 = vpop.f32.mrf.mxu0
    %v281 = vadd.f32 %v71, %v280
    %v282 = vpop.f32.mrf.mxu0
    %v283 = vpop.f32.mrf.mxu0
    %284 = vdwg.mxu0
    %285 = vmatprep.subr.bf16.mxu0 %v211
    %286 = vmatpush1.bf16.msra.mxu0 %v210
    %287 = vmatprep.subr.bf16.mxu0 %v207
    %288 = vmatpush1.bf16.msra.mxu0 %v206
    %289 = vmatprep.subr.bf16.mxu0 %v203
    %290 = vmatpush1.bf16.msra.mxu0 %v202
    %291 = vmatprep.subr.bf16.mxu0 %v199
    %292 = vmatpush1.bf16.msra.mxu0 %v198
    %293 = vmatprep.subr.bf16.mxu0 %v195
    %294 = vmatpush1.bf16.msra.mxu0 %v194
    %295 = vmatprep.subr.bf16.mxu0 %v191
    %296 = vmatpush1.bf16.msra.mxu0 %v190
    %297 = vmatprep.subr.bf16.mxu0 %v187
    %298 = vmatpush1.bf16.msra.mxu0 %v186
    %299 = vmatprep.subr.bf16.mxu0 %v183
    %300 = vmatpush1.bf16.msra.mxu0 %v182
    %301 = vmatprep.subr.bf16.mxu0 0
    %302 = vmatpush2.bf16.msra.mxu0 0
    %303 = vmatprep.subr.bf16.mxu0 0
    %304 = vmatpush2.bf16.msra.mxu0 0
    %305 = vmatprep.subr.bf16.mxu0 0
    %306 = vmatpush2.bf16.msra.mxu0 0
    %307 = vmatprep.subr.bf16.mxu0 0
    %308 = vmatpush2.bf16.msra.mxu0 0
    %309 = vmatprep.subr.bf16.mxu0 0
    %310 = vmatpush2.bf16.msra.mxu0 0
    %311 = vmatprep.subr.bf16.mxu0 0
    %312 = vmatpush2.bf16.msra.mxu0 0
    %313 = vmatprep.subr.bf16.mxu0 0
    %314 = vmatpush2.bf16.msra.mxu0 0
    %315 = vmatprep.subr.bf16.mxu0 0
    %316 = vmatpush2.bf16.msra.mxu0 0
    %317 = vmatprep.mubr.bf16.mxu0 0
    %318 = vmatmul.mubr.bf16.gmra.mxu0 %v29
    %v319 = vpop.f32.mrf.mxu0
    %v320 = vadd.f32 %v75, %v319
    %v321 = vpop.f32.mrf.mxu0
    %v322 = vadd.f32 %v79, %v321
    %v323 = vpop.f32.mrf.mxu0
    %v324 = vpop.f32.mrf.mxu0
    %325 = vdwg.mxu0
    %v326 = vmul.f32 %v279, 0.5
    %v327 = vmul.f32 %v281, 0.5
    %v328 = vmul.f32 %v320, 0.5
    %v329 = vmul.f32 %v322, 0.5
    %v330 = vmul.f32 %v279, 0.70710677
    %v331 = vmul.f32 %v281, 0.70710677
    %v332 = vmul.f32 %v320, 0.70710677
    %v333 = vmul.f32 %v322, 0.70710677
    %vm334 = vcmp.ge.f32.partialorder %v330, 0.0
    %vm335 = vcmp.ge.f32.partialorder %v331, 0.0
    %vm336 = vcmp.ge.f32.partialorder %v332, 0.0
    %vm337 = vcmp.ge.f32.partialorder %v333, 0.0
    %v338 = vsel %vm334, 1.0, -1.0
    %v339 = vsel %vm335, 1.0, -1.0
    %v340 = vsel %vm336, 1.0, -1.0
    %v341 = vsel %vm337, 1.0, -1.0
    %v342 = vand.u32 2147483647, %v330
    %v343 = vand.u32 2147483647, %v331
    %v344 = vand.u32 2147483647, %v332
    %v345 = vand.u32 2147483647, %v333
    %v346 = vmul.f32 %v342, 0.3275911
    %v347 = vmul.f32 %v343, 0.3275911
    %v348 = vmul.f32 %v344, 0.3275911
    %v349 = vmul.f32 %v345, 0.3275911
    %v350 = vadd.f32 %v346, 1.0
    %v351 = vadd.f32 %v347, 1.0
    %v352 = vadd.f32 %v348, 1.0
    %v353 = vadd.f32 %v349, 1.0
    %v354 = vrcp.pop %v350
    %v355 = vmul.f32 1.0, %v354
    %v356 = vrcp.pop %v351
    %v357 = vmul.f32 1.0, %v356
    %v358 = vrcp.pop %v352
    %v359 = vmul.f32 1.0, %v358
    %v360 = vrcp.pop %v353
    %v361 = vmul.f32 1.0, %v360
    %v362 = vmul.f32 %v355, 1.0614054
    %v363 = vmul.f32 %v357, 1.0614054
    %v364 = vmul.f32 %v359, 1.0614054
    %v365 = vmul.f32 %v361, 1.0614054
    %v366 = vadd.f32 %v362, -1.4531521
    %v367 = vadd.f32 %v363, -1.4531521
    %v368 = vadd.f32 %v364, -1.4531521
    %v369 = vadd.f32 %v365, -1.4531521
    %v370 = vmul.f32 %v355, %v366
    %v371 = vmul.f32 %v357, %v367
    %v372 = vmul.f32 %v359, %v368
    %v373 = vmul.f32 %v361, %v369
    %v374 = vadd.f32 %v370, 1.4214138
    %v375 = vadd.f32 %v371, 1.4214138
    %v376 = vadd.f32 %v372, 1.4214138
    %v377 = vadd.f32 %v373, 1.4214138
    %v378 = vmul.f32 %v355, %v374
    %v379 = vmul.f32 %v357, %v375
    %v380 = vmul.f32 %v359, %v376
    %v381 = vmul.f32 %v361, %v377
    %v382 = vadd.f32 %v378, -0.28449672
    %v383 = vadd.f32 %v379, -0.28449672
    %v384 = vadd.f32 %v380, -0.28449672
    %v385 = vadd.f32 %v381, -0.28449672
    %v386 = vmul.f32 %v355, %v382
    %v387 = vmul.f32 %v357, %v383
    %v388 = vmul.f32 %v359, %v384
    %v389 = vmul.f32 %v361, %v385
    %v390 = vadd.f32 %v386, 0.2548296
    %v391 = vadd.f32 %v387, 0.2548296
    %v392 = vadd.f32 %v388, 0.2548296
    %v393 = vadd.f32 %v389, 0.2548296
    %v394 = vmul.f32 %v355, %v390
    %v395 = vmul.f32 %v357, %v391
    %v396 = vmul.f32 %v359, %v392
    %v397 = vmul.f32 %v361, %v393
    %v398 = vsub.f32 0.0, %v342
    %v399 = vsub.f32 0.0, %v343
    %v400 = vsub.f32 0.0, %v344
    %v401 = vsub.f32 0.0, %v345
    %v402 = vmul.f32 %v398, %v342
    %v403 = vmul.f32 %v399, %v343
    %v404 = vmul.f32 %v400, %v344
    %v405 = vmul.f32 %v401, %v345
    %v406 = vmul.f32 %v402, 1.442695
    %v407 = vpow.pop %v406
    %v408 = vmul.f32 %v403, 1.442695
    %v409 = vpow.pop %v408
    %v410 = vmul.f32 %v404, 1.442695
    %v411 = vpow.pop %v410
    %v412 = vmul.f32 %v405, 1.442695
    %v413 = vpow.pop %v412
    %v414 = vmul.f32 %v394, %v407
    %v415 = vmul.f32 %v395, %v409
    %v416 = vmul.f32 %v396, %v411
    %v417 = vmul.f32 %v397, %v413
    %v418 = vsub.f32 1.0, %v414
    %v419 = vsub.f32 1.0, %v415
    %v420 = vsub.f32 1.0, %v416
    %v421 = vsub.f32 1.0, %v417
    %v422 = vmul.f32 %v338, %v418
    %v423 = vmul.f32 %v339, %v419
    %v424 = vmul.f32 %v340, %v420
    %v425 = vmul.f32 %v341, %v421
    %v426 = vadd.f32 %v422, 1.0
    %v427 = vadd.f32 %v423, 1.0
    %v428 = vadd.f32 %v424, 1.0
    %v429 = vadd.f32 %v425, 1.0
    %v430 = vmul.f32 %v326, %v426
    %v431 = vmul.f32 %v327, %v427
    %v432 = vmul.f32 %v328, %v428
    %v433 = vmul.f32 %v329, %v429
    %v434 = vpack.c.bf16 %v430, %v430
    %v435 = vpack.c.bf16 %v431, %v431
    %v436 = vpack.c.bf16 %v432, %v432
    %v437 = vpack.c.bf16 %v433, %v433
    %v438 = vld [vmem:[%s3] sm:$0xf]
    %v439 = vld [vmem:[%s3 + $0x4] sm:$0xf]
    %v440 = vld [vmem:[%s3 + $0x8] sm:$0xf]
    %v441 = vld [vmem:[%s3 + $0xc] sm:$0xf]
    %v442 = vld [vmem:[%s3 + $0x10] sm:$0xf]
    %v443 = vld [vmem:[%s3 + $0x14] sm:$0xf]
    %v444 = vld [vmem:[%s3 + $0x18] sm:$0xf]
    %v445 = vld [vmem:[%s3 + $0x1c] sm:$0xf]
    %v446 = vld [vmem:[%s3 + $0x20] sm:$0xf]
    %v447 = vld [vmem:[%s3 + $0x24] sm:$0xf]
    %v448 = vld [vmem:[%s3 + $0x28] sm:$0xf]
    %v449 = vld [vmem:[%s3 + $0x2c] sm:$0xf]
    %v450 = vld [vmem:[%s3 + $0x30] sm:$0xf]
    %v451 = vld [vmem:[%s3 + $0x34] sm:$0xf]
    %v452 = vld [vmem:[%s3 + $0x38] sm:$0xf]
    %v453 = vld [vmem:[%s3 + $0x3c] sm:$0xf]
    %v454 = vld [vmem:[%s3 + $0x40] sm:$0xf]
    %v455 = vld [vmem:[%s3 + $0x44] sm:$0xf]
    %v456 = vld [vmem:[%s3 + $0x48] sm:$0xf]
    %v457 = vld [vmem:[%s3 + $0x4c] sm:$0xf]
    %v458 = vld [vmem:[%s3 + $0x50] sm:$0xf]
    %v459 = vld [vmem:[%s3 + $0x54] sm:$0xf]
    %v460 = vld [vmem:[%s3 + $0x58] sm:$0xf]
    %v461 = vld [vmem:[%s3 + $0x5c] sm:$0xf]
    %v462 = vld [vmem:[%s3 + $0x60] sm:$0xf]
    %v463 = vld [vmem:[%s3 + $0x64] sm:$0xf]
    %v464 = vld [vmem:[%s3 + $0x68] sm:$0xf]
    %v465 = vld [vmem:[%s3 + $0x6c] sm:$0xf]
    %v466 = vld [vmem:[%s3 + $0x70] sm:$0xf]
    %v467 = vld [vmem:[%s3 + $0x74] sm:$0xf]
    %v468 = vld [vmem:[%s3 + $0x78] sm:$0xf]
    %v469 = vld [vmem:[%s3 + $0x7c] sm:$0xf]
    %v470 = vld [vmem:[%s3 + $0x80] sm:$0xf]
    %v471 = vld [vmem:[%s3 + $0x84] sm:$0xf]
    %v472 = vld [vmem:[%s3 + $0x88] sm:$0xf]
    %v473 = vld [vmem:[%s3 + $0x8c] sm:$0xf]
    %v474 = vld [vmem:[%s3 + $0x90] sm:$0xf]
    %v475 = vld [vmem:[%s3 + $0x94] sm:$0xf]
    %v476 = vld [vmem:[%s3 + $0x98] sm:$0xf]
    %v477 = vld [vmem:[%s3 + $0x9c] sm:$0xf]
    %v478 = vld [vmem:[%s3 + $0xa0] sm:$0xf]
    %v479 = vld [vmem:[%s3 + $0xa4] sm:$0xf]
    %v480 = vld [vmem:[%s3 + $0xa8] sm:$0xf]
    %v481 = vld [vmem:[%s3 + $0xac] sm:$0xf]
    %v482 = vld [vmem:[%s3 + $0xb0] sm:$0xf]
    %v483 = vld [vmem:[%s3 + $0xb4] sm:$0xf]
    %v484 = vld [vmem:[%s3 + $0xb8] sm:$0xf]
    %v485 = vld [vmem:[%s3 + $0xbc] sm:$0xf]
    %v486 = vld [vmem:[%s3 + $0xc0] sm:$0xf]
    %v487 = vld [vmem:[%s3 + $0xc4] sm:$0xf]
    %v488 = vld [vmem:[%s3 + $0xc8] sm:$0xf]
    %v489 = vld [vmem:[%s3 + $0xcc] sm:$0xf]
    %v490 = vld [vmem:[%s3 + $0xd0] sm:$0xf]
    %v491 = vld [vmem:[%s3 + $0xd4] sm:$0xf]
    %v492 = vld [vmem:[%s3 + $0xd8] sm:$0xf]
    %v493 = vld [vmem:[%s3 + $0xdc] sm:$0xf]
    %v494 = vld [vmem:[%s3 + $0xe0] sm:$0xf]
    %v495 = vld [vmem:[%s3 + $0xe4] sm:$0xf]
    %v496 = vld [vmem:[%s3 + $0xe8] sm:$0xf]
    %v497 = vld [vmem:[%s3 + $0xec] sm:$0xf]
    %v498 = vld [vmem:[%s3 + $0xf0] sm:$0xf]
    %v499 = vld [vmem:[%s3 + $0xf4] sm:$0xf]
    %v500 = vld [vmem:[%s3 + $0xf8] sm:$0xf]
    %v501 = vld [vmem:[%s3 + $0xfc] sm:$0xf]
    %v502 = vld [vmem:[%s4] sm:$0x1]
    %v504 = vlaneseq
    %v505 = vshrl.u32 %v504, 7
    %v506 = vsub.s32 0, %v505
    %v507 = vrot.slane %v502, %v506
    %v573 = vunpack.c.l.b16 %v438
    %v574 = vunpack.c.l.b16 %v439
    %v575 = vunpack.c.l.b16 %v440
    %v576 = vunpack.c.l.b16 %v441
    %v577 = vunpack.c.l.b16 %v442
    %v578 = vunpack.c.l.b16 %v443
    %v579 = vunpack.c.l.b16 %v444
    %v580 = vunpack.c.l.b16 %v445
    %v581 = vunpack.c.l.b16 %v446
    %v582 = vunpack.c.l.b16 %v447
    %v583 = vunpack.c.l.b16 %v448
    %v584 = vunpack.c.l.b16 %v449
    %v585 = vunpack.c.l.b16 %v450
    %v586 = vunpack.c.l.b16 %v451
    %v587 = vunpack.c.l.b16 %v452
    %v588 = vunpack.c.l.b16 %v453
    %v589 = vunpack.c.l.b16 %v454
    %v590 = vunpack.c.l.b16 %v455
    %v591 = vunpack.c.l.b16 %v456
    %v592 = vunpack.c.l.b16 %v457
    %v593 = vunpack.c.l.b16 %v458
    %v594 = vunpack.c.l.b16 %v459
    %v595 = vunpack.c.l.b16 %v460
    %v596 = vunpack.c.l.b16 %v461
    %v597 = vunpack.c.l.b16 %v462
    %v598 = vunpack.c.l.b16 %v463
    %v599 = vunpack.c.l.b16 %v464
    %v600 = vunpack.c.l.b16 %v465
    %v601 = vunpack.c.l.b16 %v466
    %v602 = vunpack.c.l.b16 %v467
    %v603 = vunpack.c.l.b16 %v468
    %v604 = vunpack.c.l.b16 %v469
    %v605 = vunpack.c.l.b16 %v470
    %v606 = vunpack.c.l.b16 %v471
    %v607 = vunpack.c.l.b16 %v472
    %v608 = vunpack.c.l.b16 %v473
    %v609 = vunpack.c.l.b16 %v474
    %v610 = vunpack.c.l.b16 %v475
    %v611 = vunpack.c.l.b16 %v476
    %v612 = vunpack.c.l.b16 %v477
    %v613 = vunpack.c.l.b16 %v478
    %v614 = vunpack.c.l.b16 %v479
    %v615 = vunpack.c.l.b16 %v480
    %v616 = vunpack.c.l.b16 %v481
    %v617 = vunpack.c.l.b16 %v482
    %v618 = vunpack.c.l.b16 %v483
    %v619 = vunpack.c.l.b16 %v484
    %v620 = vunpack.c.l.b16 %v485
    %v621 = vunpack.c.l.b16 %v486
    %v622 = vunpack.c.l.b16 %v487
    %v623 = vunpack.c.l.b16 %v488
    %v624 = vunpack.c.l.b16 %v489
    %v625 = vunpack.c.l.b16 %v490
    %v626 = vunpack.c.l.b16 %v491
    %v627 = vunpack.c.l.b16 %v492
    %v628 = vunpack.c.l.b16 %v493
    %v629 = vunpack.c.l.b16 %v494
    %v630 = vunpack.c.l.b16 %v495
    %v631 = vunpack.c.l.b16 %v496
    %v632 = vunpack.c.l.b16 %v497
    %v633 = vunpack.c.l.b16 %v498
    %v634 = vunpack.c.l.b16 %v499
    %v635 = vunpack.c.l.b16 %v500
    %v636 = vunpack.c.l.b16 %v501
    %v637 = vpack.c.b16 %v574, %v573
    %v638 = vpack.c.b16 %v576, %v575
    %v639 = vpack.c.b16 %v578, %v577
    %v640 = vpack.c.b16 %v580, %v579
    %v641 = vpack.c.b16 %v582, %v581
    %v642 = vpack.c.b16 %v584, %v583
    %v643 = vpack.c.b16 %v586, %v585
    %v644 = vpack.c.b16 %v588, %v587
    %v645 = vpack.c.b16 %v590, %v589
    %v646 = vpack.c.b16 %v592, %v591
    %v647 = vpack.c.b16 %v594, %v593
    %v648 = vpack.c.b16 %v596, %v595
    %v649 = vpack.c.b16 %v598, %v597
    %v650 = vpack.c.b16 %v600, %v599
    %v651 = vpack.c.b16 %v602, %v601
    %v652 = vpack.c.b16 %v604, %v603
    %v653 = vpack.c.b16 %v606, %v605
    %v654 = vpack.c.b16 %v608, %v607
    %v655 = vpack.c.b16 %v610, %v609
    %v656 = vpack.c.b16 %v612, %v611
    %v657 = vpack.c.b16 %v614, %v613
    %v658 = vpack.c.b16 %v616, %v615
    %v659 = vpack.c.b16 %v618, %v617
    %v660 = vpack.c.b16 %v620, %v619
    %v661 = vpack.c.b16 %v622, %v621
    %v662 = vpack.c.b16 %v624, %v623
    %v663 = vpack.c.b16 %v626, %v625
    %v664 = vpack.c.b16 %v628, %v627
    %v665 = vpack.c.b16 %v630, %v629
    %v666 = vpack.c.b16 %v632, %v631
    %v667 = vpack.c.b16 %v634, %v633
    %v668 = vpack.c.b16 %v636, %v635
    %701 = vmatprep.subr.bf16.mxu0 0
    %702 = vmatpush1.bf16.msra.mxu0 %v644
    %703 = vmatprep.subr.bf16.mxu0 0
    %704 = vmatpush1.bf16.msra.mxu0 %v643
    %705 = vmatprep.subr.bf16.mxu0 0
    %706 = vmatpush1.bf16.msra.mxu0 %v642
    %707 = vmatprep.subr.bf16.mxu0 0
    %708 = vmatpush1.bf16.msra.mxu0 %v641
    %709 = vmatprep.subr.bf16.mxu0 0
    %710 = vmatpush1.bf16.msra.mxu0 %v640
    %711 = vmatprep.subr.bf16.mxu0 0
    %712 = vmatpush1.bf16.msra.mxu0 %v639
    %713 = vmatprep.subr.bf16.mxu0 0
    %714 = vmatpush1.bf16.msra.mxu0 %v638
    %715 = vmatprep.subr.bf16.mxu0 0
    %716 = vmatpush1.bf16.msra.mxu0 %v637
    %717 = vmatprep.subr.bf16.mxu0 0
    %718 = vmatpush2.bf16.msra.mxu0 %v652
    %719 = vmatprep.subr.bf16.mxu0 0
    %720 = vmatpush2.bf16.msra.mxu0 %v651
    %721 = vmatprep.subr.bf16.mxu0 0
    %722 = vmatpush2.bf16.msra.mxu0 %v650
    %723 = vmatprep.subr.bf16.mxu0 0
    %724 = vmatpush2.bf16.msra.mxu0 %v649
    %725 = vmatprep.subr.bf16.mxu0 0
    %726 = vmatpush2.bf16.msra.mxu0 %v648
    %727 = vmatprep.subr.bf16.mxu0 0
    %728 = vmatpush2.bf16.msra.mxu0 %v647
    %729 = vmatprep.subr.bf16.mxu0 0
    %730 = vmatpush2.bf16.msra.mxu0 %v646
    %731 = vmatprep.subr.bf16.mxu0 0
    %732 = vmatpush2.bf16.msra.mxu0 %v645
    %733 = vmatprep.mubr.bf16.mxu0 %v435
    %734 = vmatmul.mubr.bf16.gmra.mxu0 %v434
    %v735 = vpop.f32.mrf.mxu0
    %v736 = vadd.f32 %v507, %v735
    %v737 = vpop.f32.mrf.mxu0
    %v738 = vpop.f32.mrf.mxu0
    %v739 = vpop.f32.mrf.mxu0
    %740 = vdwg.mxu0
    %741 = vmatprep.subr.bf16.mxu0 0
    %742 = vmatpush1.bf16.msra.mxu0 %v660
    %743 = vmatprep.subr.bf16.mxu0 0
    %744 = vmatpush1.bf16.msra.mxu0 %v659
    %745 = vmatprep.subr.bf16.mxu0 0
    %746 = vmatpush1.bf16.msra.mxu0 %v658
    %747 = vmatprep.subr.bf16.mxu0 0
    %748 = vmatpush1.bf16.msra.mxu0 %v657
    %749 = vmatprep.subr.bf16.mxu0 0
    %750 = vmatpush1.bf16.msra.mxu0 %v656
    %751 = vmatprep.subr.bf16.mxu0 0
    %752 = vmatpush1.bf16.msra.mxu0 %v655
    %753 = vmatprep.subr.bf16.mxu0 0
    %754 = vmatpush1.bf16.msra.mxu0 %v654
    %755 = vmatprep.subr.bf16.mxu0 0
    %756 = vmatpush1.bf16.msra.mxu0 %v653
    %757 = vmatprep.subr.bf16.mxu0 0
    %758 = vmatpush2.bf16.msra.mxu0 %v668
    %759 = vmatprep.subr.bf16.mxu0 0
    %760 = vmatpush2.bf16.msra.mxu0 %v667
    %761 = vmatprep.subr.bf16.mxu0 0
    %762 = vmatpush2.bf16.msra.mxu0 %v666
    %763 = vmatprep.subr.bf16.mxu0 0
    %764 = vmatpush2.bf16.msra.mxu0 %v665
    %765 = vmatprep.subr.bf16.mxu0 0
    %766 = vmatpush2.bf16.msra.mxu0 %v664
    %767 = vmatprep.subr.bf16.mxu0 0
    %768 = vmatpush2.bf16.msra.mxu0 %v663
    %769 = vmatprep.subr.bf16.mxu0 0
    %770 = vmatpush2.bf16.msra.mxu0 %v662
    %771 = vmatprep.subr.bf16.mxu0 0
    %772 = vmatpush2.bf16.msra.mxu0 %v661
    %773 = vmatprep.mubr.bf16.mxu0 %v437
    %774 = vmatmul.mubr.bf16.gmra.mxu0 %v436
    %v775 = vpop.f32.mrf.mxu0
    %v776 = vadd.f32 %v736, %v775
    %v777 = vpop.f32.mrf.mxu0
    %v778 = vpop.f32.mrf.mxu0
    %v779 = vpop.f32.mrf.mxu0
    %780 = vdwg.mxu0
    %v781 = vmul.f32 %v776, 0.5
    %v782 = vmul.f32 %v776, 0.70710677
    %vm783 = vcmp.ge.f32.partialorder %v782, 0.0
    %v784 = vsel %vm783, 1.0, -1.0
    %v785 = vand.u32 2147483647, %v782
    %v786 = vmul.f32 %v785, 0.3275911
    %v787 = vadd.f32 %v786, 1.0
    %v788 = vrcp.pop %v787
    %v789 = vmul.f32 1.0, %v788
    %v790 = vmul.f32 %v789, 1.0614054
    %v791 = vadd.f32 %v790, -1.4531521
    %v792 = vmul.f32 %v789, %v791
    %v793 = vadd.f32 %v792, 1.4214138
    %v794 = vmul.f32 %v789, %v793
    %v795 = vadd.f32 %v794, -0.28449672
    %v796 = vmul.f32 %v789, %v795
    %v797 = vadd.f32 %v796, 0.2548296
    %v798 = vmul.f32 %v789, %v797
    %v799 = vsub.f32 0.0, %v785
    %v800 = vmul.f32 %v799, %v785
    %v801 = vmul.f32 %v800, 1.442695
    %v802 = vpow.pop %v801
    %v803 = vmul.f32 %v798, %v802
    %v804 = vsub.f32 1.0, %v803
    %v805 = vmul.f32 %v784, %v804
    %v806 = vadd.f32 %v805, 1.0
    %v807 = vmul.f32 %v781, %v806
    %v808 = vpack.c.bf16 %v807, %v807
    %v809 = vld [vmem:[%s5] sm:$0xf]
    %v810 = vld [vmem:[%s5 + $0x4] sm:$0xf]
    %v811 = vld [vmem:[%s5 + $0x8] sm:$0xf]
    %v812 = vld [vmem:[%s5 + $0xc] sm:$0xf]
    %v813 = vld [vmem:[%s5 + $0x10] sm:$0xf]
    %v814 = vld [vmem:[%s5 + $0x14] sm:$0xf]
    %v815 = vld [vmem:[%s5 + $0x18] sm:$0xf]
    %v816 = vld [vmem:[%s5 + $0x1c] sm:$0xf]
    %v817 = vld [vmem:[%s5 + $0x20] sm:$0xf]
    %v818 = vld [vmem:[%s5 + $0x24] sm:$0xf]
    %v819 = vld [vmem:[%s5 + $0x28] sm:$0xf]
    %v820 = vld [vmem:[%s5 + $0x2c] sm:$0xf]
    %v821 = vld [vmem:[%s5 + $0x30] sm:$0xf]
    %v822 = vld [vmem:[%s5 + $0x34] sm:$0xf]
    %v823 = vld [vmem:[%s5 + $0x38] sm:$0xf]
    %v824 = vld [vmem:[%s5 + $0x3c] sm:$0xf]
    %v825 = vld [vmem:[%s6] sm:$0x1]
    %v827 = vlaneseq
    %v828 = vshrl.u32 %v827, 7
    %v829 = vsub.s32 0, %v828
    %v830 = vrot.slane %v825, %v829
    %v848 = vunpack.c.l.b16 %v809
    %v849 = vunpack.c.l.b16 %v810
    %v850 = vunpack.c.l.b16 %v811
    %v851 = vunpack.c.l.b16 %v812
    %v852 = vunpack.c.l.b16 %v813
    %v853 = vunpack.c.l.b16 %v814
    %v854 = vunpack.c.l.b16 %v815
    %v855 = vunpack.c.l.b16 %v816
    %v856 = vunpack.c.l.b16 %v817
    %v857 = vunpack.c.l.b16 %v818
    %v858 = vunpack.c.l.b16 %v819
    %v859 = vunpack.c.l.b16 %v820
    %v860 = vunpack.c.l.b16 %v821
    %v861 = vunpack.c.l.b16 %v822
    %v862 = vunpack.c.l.b16 %v823
    %v863 = vunpack.c.l.b16 %v824
    %v864 = vpack.c.b16 %v849, %v848
    %v865 = vpack.c.b16 %v851, %v850
    %v866 = vpack.c.b16 %v853, %v852
    %v867 = vpack.c.b16 %v855, %v854
    %v868 = vpack.c.b16 %v857, %v856
    %v869 = vpack.c.b16 %v859, %v858
    %v870 = vpack.c.b16 %v861, %v860
    %v871 = vpack.c.b16 %v863, %v862
    %880 = vmatprep.subr.bf16.mxu0 0
    %881 = vmatpush1.bf16.msra.mxu0 %v871
    %882 = vmatprep.subr.bf16.mxu0 0
    %883 = vmatpush1.bf16.msra.mxu0 %v870
    %884 = vmatprep.subr.bf16.mxu0 0
    %885 = vmatpush1.bf16.msra.mxu0 %v869
    %886 = vmatprep.subr.bf16.mxu0 0
    %887 = vmatpush1.bf16.msra.mxu0 %v868
    %888 = vmatprep.subr.bf16.mxu0 0
    %889 = vmatpush1.bf16.msra.mxu0 %v867
    %890 = vmatprep.subr.bf16.mxu0 0
    %891 = vmatpush1.bf16.msra.mxu0 %v866
    %892 = vmatprep.subr.bf16.mxu0 0
    %893 = vmatpush1.bf16.msra.mxu0 %v865
    %894 = vmatprep.subr.bf16.mxu0 0
    %895 = vmatpush1.bf16.msra.mxu0 %v864
    %896 = vmatprep.subr.bf16.mxu0 0
    %897 = vmatpush2.bf16.msra.mxu0 0
    %898 = vmatprep.subr.bf16.mxu0 0
    %899 = vmatpush2.bf16.msra.mxu0 0
    %900 = vmatprep.subr.bf16.mxu0 0
    %901 = vmatpush2.bf16.msra.mxu0 0
    %902 = vmatprep.subr.bf16.mxu0 0
    %903 = vmatpush2.bf16.msra.mxu0 0
    %904 = vmatprep.subr.bf16.mxu0 0
    %905 = vmatpush2.bf16.msra.mxu0 0
    %906 = vmatprep.subr.bf16.mxu0 0
    %907 = vmatpush2.bf16.msra.mxu0 0
    %908 = vmatprep.subr.bf16.mxu0 0
    %909 = vmatpush2.bf16.msra.mxu0 0
    %910 = vmatprep.subr.bf16.mxu0 0
    %911 = vmatpush2.bf16.msra.mxu0 0
    %912 = vmatprep.mubr.bf16.mxu0 0
    %913 = vmatmul.mubr.bf16.gmra.mxu0 %v808
    %v914 = vpop.f32.mrf.mxu0
    %v915 = vadd.f32 %v830, %v914
    %v916 = vpop.f32.mrf.mxu0
    %v917 = vpop.f32.mrf.mxu0
    %v918 = vpop.f32.mrf.mxu0
    %919 = vdwg.mxu0
    %920 = vst [vmem:[#allocation2] sm:$0x3] %v915
    // Predicated region
    $region30: #{network_forward.3} parent=1 // pred_check
      _
    $region31: #{network_forward.3} parent=1 // pred_check_branch
      %922 = sbr.rel (0) target = $region33
    $region32: #{network_forward.3} parent=1 // pred_region
      %s924 = ssub.s32 32, 32
      %925 = vsyncadd [#allocation3], %s924
      %s927 = sshll.u32 [#allocation2], 4
      %s928 = int_to_ptr.vmem [resolvable:$true] %s927
      %930 = dma.vmem_to_hbm [thread:$0]  %s928, 32, %s7, [#allocation3]
    $region33: #{network_forward.3} parent=1 // pred_fallthru
      _
    // Predicated region
    $region34: #{network_forward.3} parent=1 // pred_check
      _
    $region35: #{network_forward.3} parent=1 // pred_check_branch
      %932 = sbr.rel (0) target = $region37
    $region36: #{network_forward.3} parent=1 // pred_region
      %933 = dma.done [#allocation3], 32
    $region37: #{network_forward.3} parent=1 // pred_fallthru
      _
    %934 = vsyncpa [#allocation3], 1

</llo_original>
